<compile_context>
chip_gen: v7x
topology: tpu7x:2x2x1
jax: 0.10.0
libtpu: 0.0.40
codegen_flags: <defaults>
</compile_context>

<pallas_src>
import math

import jax
import jax.numpy as jnp
from jax.experimental import pallas as pl
from jax.experimental.pallas import tpu as pltpu


# ---------------------------------------------------------------------------
# In-kernel helpers
# ---------------------------------------------------------------------------
def _mm(a, w):
    """(TB, L, K) x (K, N) on the MXU; operands cast to weight dtype (bf16), f32 accum."""
    tb, l, k = a.shape
    out = jnp.dot(a.reshape(tb * l, k).astype(w.dtype), w,
                  preferred_element_type=jnp.float32)
    return out.reshape(tb, l, w.shape[1])


def _shift(y, d, mask):
    """y[:, t, :] -> y[:, t-d, :] with zeros for t < d (causal shift of a conv-tap
    result). XLU roll over the flattened (batch*time) sublane axis + a HOISTED mask.
    Cross-batch wraparound only reaches rows with t < d, which are zeroed anyway."""
    tb, l, c = y.shape
    rolled = pltpu.roll(y.reshape(tb * l, c), d, axis=0).reshape(tb, l, c)
    return jnp.where(mask, rolled, 0.0)


# ---------------------------------------------------------------------------
# Fused kernel: TCN (3 blocks) + SE + global pool + MLP head
# ---------------------------------------------------------------------------
def _make_kernel(l_valid, act_dtype):
    def kernel(x_ref,
               l0w_ref, l0b_ref, w20_ref,
               w11_ref, w21_ref, wd1_ref, b1s_ref,
               w12_ref, w22_ref, wd2_ref, b2s_ref,
               wse1_ref, wse2_ref, wfc1_ref, bfc1_ref, wfc2_ref, bfc2_ref,
               o_ref):
        tb, lp, _ = x_ref.shape
        x = x_ref[...]                                   # (TB, Lp, 1) f32

        # Hoisted causal masks (t >= d), one per dilation, reused by both convs of a block.
        def ge_mask(c, d):
            t = jax.lax.broadcasted_iota(jnp.int32, (tb, lp, c), 1)
            return t >= d
        m1, m2, m4 = ge_mask(128, 1), ge_mask(64, 2), ge_mask(32, 4)

        # ---- TemporalBlock 0: 1 -> 128 ch, dilation 1 (Cin=1: VPU broadcast path) ----
        xb = jnp.broadcast_to(x, (tb, lp, 128))          # lane-broadcast ONCE, reused 3x
        h1 = jnp.maximum(_shift(xb * l0w_ref[0], 1, m1)  # conv1: shift the tap-0 result
                         + xb * l0w_ref[1] + l0b_ref[0], 0.0)
        res = xb * l0w_ref[2] + l0b_ref[2]               # 1x1 downsample (f32)
        h1 = h1.astype(act_dtype)
        h2 = jnp.maximum(_shift(_mm(h1, w20_ref[0]), 1, m1)
                         + _mm(h1, w20_ref[1]) + l0b_ref[1], 0.0)
        a = jnp.maximum(h2 + res, 0.0).astype(act_dtype)                 # (TB, Lp, 128)

        # ---- TemporalBlock 1: 128 -> 64 ch, dilation 2 --------------------------------
        h1 = jnp.maximum(_shift(_mm(a, w11_ref[0]), 2, m2)
                         + _mm(a, w11_ref[1]) + b1s_ref[0], 0.0).astype(act_dtype)
        h2 = jnp.maximum(_shift(_mm(h1, w21_ref[0]), 2, m2)
                         + _mm(h1, w21_ref[1]) + b1s_ref[1], 0.0)
        res = _mm(a, wd1_ref[...]) + b1s_ref[2]
        a = jnp.maximum(h2 + res, 0.0).astype(act_dtype)                 # (TB, Lp, 64)

        # ---- TemporalBlock 2: 64 -> 32 ch, dilation 4 ----------------------------------
        h1 = jnp.maximum(_shift(_mm(a, w12_ref[0]), 4, m4)
                         + _mm(a, w12_ref[1]) + b2s_ref[0], 0.0).astype(act_dtype)
        h2 = jnp.maximum(_shift(_mm(h1, w22_ref[0]), 4, m4)
                         + _mm(h1, w22_ref[1]) + b2s_ref[1], 0.0)
        res = _mm(a, wd2_ref[...]) + b2s_ref[2]
        a = jnp.maximum(h2 + res, 0.0)                                   # f32, (TB, Lp, 32)

        # ---- SE + global average pool + MLP head (algebraically simplified) ------------
        # TCNSE: mean_L(x*s + x) == (1 + s) * mean_L(x), s = sigmoid(SE_fc(mean_L(x))).
        if lp != l_valid:                                 # mask time padding (static cond)
            tmask = jax.lax.broadcasted_iota(jnp.int32, (tb, lp, 1), 1) < l_valid
            a = jnp.where(tmask, a, 0.0)
        p = jnp.sum(a, axis=1) * (1.0 / l_valid)          # (TB, 32) mean over valid time
        z = jnp.maximum(jnp.dot(p, wse1_ref[...], preferred_element_type=jnp.float32), 0.0)
        s = jax.nn.sigmoid(jnp.dot(z, wse2_ref[...], preferred_element_type=jnp.float32))
        g = p * (1.0 + s)
        h = jnp.maximum(jnp.dot(g, wfc1_ref[...], preferred_element_type=jnp.float32)
                        + bfc1_ref[...], 0.0)
        o_ref[...] = (jnp.dot(h, wfc2_ref[...], preferred_element_type=jnp.float32)
                      + bfc2_ref[...])
    return kernel


# ---------------------------------------------------------------------------
# Wrapper (generation-aware tiling / dtypes)
# ---------------------------------------------------------------------------
def _tpu_config():
    """(activation dtype, physical VMEM bytes) for the current TPU generation."""
    vmem = 0
    try:
        info = pltpu.get_tpu_info()
        vmem = int(getattr(info, "vmem_capacity_bytes", 0) or 0)
    except Exception:
        vmem = 0
    if not vmem:
        vmem = 64 * 1024 * 1024                        # conservative (v7x-sized) fallback
    kind = ""
    try:
        kind = jax.devices()[0].device_kind.lower()
    except Exception:
        pass
    modern = ("v6" in kind) or ("v7" in kind)          # bf16 VPU available
    act_dtype = jnp.bfloat16 if modern else jnp.float32
    return act_dtype, vmem


def _plan_batch(batch, per_row_bytes, budget_bytes):
    """(padded batch, batch tile). Tiles are multiples of 8 (or the whole batch) so the
    output block keeps a clean sublane layout; prefer >=2 grid steps (v7x megacore)."""
    cap = max(1, budget_bytes // max(per_row_bytes, 1))
    if batch <= 8:
        # TODO(synk): time-tile L (16-step halo + running pool sums) if a single batch
        # row of a very long sequence ever exceeds the VMEM budget.
        return batch, batch
    b_pad = -(-batch // 8) * 8
    tiles = [t for t in range(8, b_pad + 1, 8) if b_pad % t == 0 and t <= cap] or [8]
    multi = [t for t in tiles if b_pad // t >= 2]
    tb = max(multi) if multi else max(tiles)
    return b_pad, tb


def _const_spec(w):
    zeros = (0,) * w.ndim
    return pl.BlockSpec(w.shape, lambda i, _z=zeros: _z)   # weights stay VMEM-resident


def _flat_weights(params):
    b0, b1, b2 = params["blocks"]
    h = params["head"]
    return [
        b0["lvl0_w"], b0["b"], b0["w2"],
        b1["w1"], b1["w2"], b1["wd"], b1["b"],
        b2["w1"], b2["w2"], b2["wd"], b2["b"],
        h["wse1"], h["wse2"], h["wfc1"], h["bfc1"], h["wfc2"], h["bfc2"],
    ]


def tcnse_forward(x_ncl, params):
    """x_ncl: (B, 1, L) as in the PyTorch module. Returns (B, num_outputs)."""
    act_dtype, vmem_cap = _tpu_config()
    x = jnp.transpose(x_ncl, (0, 2, 1)).astype(jnp.float32)   # NCL -> (B, L, 1)
    B, L, _ = x.shape

    sub = 16 if act_dtype == jnp.bfloat16 else 8
    lp = -(-L // sub) * sub                     # keep (B*L, C) reshapes free (no relayout)
    if lp != L:
        x = jnp.pad(x, ((0, 0), (0, lp - L), (0, 0)))

    per_row_bytes = lp * 5120                   # upper bound on live activations / batch row
    b_pad, tb = _plan_batch(B, per_row_bytes, vmem_cap // 4)
    if b_pad != B:
        x = jnp.pad(x, ((0, b_pad - B), (0, 0), (0, 0)))

    weights = _flat_weights(params)
    nout = params["head"]["wfc2"].shape[1]
    vmem_limit = int(min(max(vmem_cap * 3 // 4, 32 * 1024 * 1024), 100 * 1024 * 1024))

    out = pl.pallas_call(
        _make_kernel(L, act_dtype),
        out_shape=jax.ShapeDtypeStruct((b_pad, nout), jnp.float32),
        grid=(b_pad // tb,),
        in_specs=[pl.BlockSpec((tb, lp, 1), lambda i: (i, 0, 0))]
                 + [_const_spec(w) for w in weights],
        out_specs=pl.BlockSpec((tb, nout), lambda i: (i, 0)),
        compiler_params=pltpu.CompilerParams(
            dimension_semantics=("parallel",),   # shard batch tiles across v7x TCs
            vmem_limit_bytes=vmem_limit),
    )(x, *weights)
    return out[:B] if b_pad != B else out


# ---------------------------------------------------------------------------
# Deterministic parameter init (weight_norm parameterization applied explicitly)
# ---------------------------------------------------------------------------
def _xavier(key, shape):
    if len(shape) == 3:
        fan_in, fan_out = shape[1] * shape[2], shape[0] * shape[2]
    else:
        fan_in, fan_out = shape[1], shape[0]
    a = math.sqrt(6.0 / (fan_in + fan_out))
    return jax.random.uniform(key, shape, dtype=jnp.float32, minval=-a, maxval=a)


def _uniform(key, shape, bound):
    return jax.random.uniform(key, shape, dtype=jnp.float32, minval=-bound, maxval=bound)


def _weight_norm(v):
    # weight = g * v / ||v|| with g initialized to ||v|| (identity at init).
    norm = jnp.sqrt(jnp.sum(v * v, axis=(1, 2), keepdims=True))
    return norm * v / norm


def _two_tap(w):
    # (cout, cin, 2) -> (2, cin, cout): [tap0 (applies to x[t-d]) ; tap1 (x[t])]
    return jnp.stack([w[:, :, 0].T, w[:, :, 1].T], axis=0)


def init_tcn_block(key, cin, cout, k=2):
    ks = jax.random.split(key, 6)
    w1 = _weight_norm(_xavier(ks[0], (cout, cin, k)))
    b1 = _uniform(ks[1], (cout,), 1.0 / math.sqrt(cin * k))
    w2 = _weight_norm(_xavier(ks[2], (cout, cout, k)))
    b2 = _uniform(ks[3], (cout,), 1.0 / math.sqrt(cout * k))
    wd = _xavier(ks[4], (cout, cin, 1))
    bd = _uniform(ks[5], (cout,), 1.0 / math.sqrt(cin))
    biases = jnp.stack([b1, b2, bd], axis=0)[:, None, :]            # (3, 1, cout) f32
    if cin == 1:
        # level 0: Cin=1 -> conv1 taps / downsample are VPU broadcast rows (f32)
        lvl0_w = jnp.stack([w1[:, 0, 0], w1[:, 0, 1], wd[:, 0, 0]], axis=0)[:, None, :]
        return dict(lvl0_w=lvl0_w, b=biases, w2=_two_tap(w2).astype(jnp.bfloat16))
    return dict(w1=_two_tap(w1).astype(jnp.bfloat16),
                w2=_two_tap(w2).astype(jnp.bfloat16),
                wd=wd[:, :, 0].T.astype(jnp.bfloat16),
                b=biases)


def init_head(key, c=32, num_outputs=1, reduction=16):
    ks = jax.random.split(key, 6)
    wse1 = _xavier(ks[0], (c // reduction, c))       # Linear(32 -> 2), no bias
    wse2 = _xavier(ks[1], (c, c // reduction))       # Linear(2 -> 32), no bias
    wfc1 = _xavier(ks[2], (c, c))
    bfc1 = _uniform(ks[3], (c,), 1.0 / math.sqrt(c))
    wfc2 = _xavier(ks[4], (num_outputs, c))
    bfc2 = _uniform(ks[5], (num_outputs,), 1.0 / math.sqrt(c))
    return dict(wse1=wse1.T, wse2=wse2.T,
                wfc1=wfc1.T, bfc1=bfc1.reshape(1, c),
                wfc2=wfc2.T, bfc2=bfc2.reshape(1, num_outputs))


def init_params(key, num_outputs=1):
    kb0, kb1, kb2, kh = jax.random.split(key, 4)
    blocks = [
        init_tcn_block(kb0, 1, 128),    # level 0, dilation 1
        init_tcn_block(kb1, 128, 64),   # level 1, dilation 2
        init_tcn_block(kb2, 64, 32),    # level 2, dilation 4
    ]
    return {"blocks": blocks, "head": init_head(kh, 32, num_outputs)}


if __name__ == "__main__":
    key = jax.random.PRNGKey(0)
    kx, kp = jax.random.split(key)
    B, L = 2, 16
    x_ncl = jax.random.normal(kx, (B, 1, L), dtype=jnp.float32)   # PyTorch NCL input
    params = init_params(kp, num_outputs=1)
    fwd = jax.jit(tcnse_forward)
    out = fwd(x_ncl, params)
    jax.block_until_ready(out)
    assert out.shape == (B, 1)
    print("KERNEL_OK")
</pallas_src>

<mosaic_0001>
module attributes {stable_mosaic.version = 11 : i64} {
  func.func @kernel(%arg0: i32, %arg1: memref<2x16x1xf32, #tpu.memory_space<vmem>>, %arg2: memref<3x1x128xf32, #tpu.memory_space<vmem>>, %arg3: memref<3x1x128xf32, #tpu.memory_space<vmem>>, %arg4: memref<2x128x128xbf16, #tpu.memory_space<vmem>>, %arg5: memref<2x128x64xbf16, #tpu.memory_space<vmem>>, %arg6: memref<2x64x64xbf16, #tpu.memory_space<vmem>>, %arg7: memref<128x64xbf16, #tpu.memory_space<vmem>>, %arg8: memref<3x1x64xf32, #tpu.memory_space<vmem>>, %arg9: memref<2x64x32xbf16, #tpu.memory_space<vmem>>, %arg10: memref<2x32x32xbf16, #tpu.memory_space<vmem>>, %arg11: memref<64x32xbf16, #tpu.memory_space<vmem>>, %arg12: memref<3x1x32xf32, #tpu.memory_space<vmem>>, %arg13: memref<32x2xf32, #tpu.memory_space<vmem>>, %arg14: memref<2x32xf32, #tpu.memory_space<vmem>>, %arg15: memref<32x32xf32, #tpu.memory_space<vmem>>, %arg16: memref<1x32xf32, #tpu.memory_space<vmem>>, %arg17: memref<32x1xf32, #tpu.memory_space<vmem>>, %arg18: memref<1x1xf32, #tpu.memory_space<vmem>>, %arg19: memref<2x1xf32, #tpu.memory_space<vmem>>) attributes {dimension_semantics = [#tpu.dimension_semantics<parallel>], iteration_bounds = array<i64: 1>, scalar_prefetch = 0 : i64, scratch_operands = 0 : i64, tpu.core_type = #tpu.core_type<tc>, window_params = [{transform_indices = @transform_0, window_bounds = array<i64: 2, 16, 1>}, {pipeline_mode = #tpu.pipeline_mode<synchronous>, transform_indices = @transform_1, window_bounds = array<i64: 3, 1, 128>}, {pipeline_mode = #tpu.pipeline_mode<synchronous>, transform_indices = @transform_2, window_bounds = array<i64: 3, 1, 128>}, {pipeline_mode = #tpu.pipeline_mode<synchronous>, transform_indices = @transform_3, window_bounds = array<i64: 2, 128, 128>}, {pipeline_mode = #tpu.pipeline_mode<synchronous>, transform_indices = @transform_4, window_bounds = array<i64: 2, 128, 64>}, {pipeline_mode = #tpu.pipeline_mode<synchronous>, transform_indices = @transform_5, window_bounds = array<i64: 2, 64, 64>}, {pipeline_mode = #tpu.pipeline_mode<synchronous>, transform_indices = @transform_6, window_bounds = array<i64: 128, 64>}, {pipeline_mode = #tpu.pipeline_mode<synchronous>, transform_indices = @transform_7, window_bounds = array<i64: 3, 1, 64>}, {pipeline_mode = #tpu.pipeline_mode<synchronous>, transform_indices = @transform_8, window_bounds = array<i64: 2, 64, 32>}, {pipeline_mode = #tpu.pipeline_mode<synchronous>, transform_indices = @transform_9, window_bounds = array<i64: 2, 32, 32>}, {pipeline_mode = #tpu.pipeline_mode<synchronous>, transform_indices = @transform_10, window_bounds = array<i64: 64, 32>}, {pipeline_mode = #tpu.pipeline_mode<synchronous>, transform_indices = @transform_11, window_bounds = array<i64: 3, 1, 32>}, {pipeline_mode = #tpu.pipeline_mode<synchronous>, transform_indices = @transform_12, window_bounds = array<i64: 32, 2>}, {pipeline_mode = #tpu.pipeline_mode<synchronous>, transform_indices = @transform_13, window_bounds = array<i64: 2, 32>}, {pipeline_mode = #tpu.pipeline_mode<synchronous>, transform_indices = @transform_14, window_bounds = array<i64: 32, 32>}, {pipeline_mode = #tpu.pipeline_mode<synchronous>, transform_indices = @transform_15, window_bounds = array<i64: 1, 32>}, {pipeline_mode = #tpu.pipeline_mode<synchronous>, transform_indices = @transform_16, window_bounds = array<i64: 32, 1>}, {pipeline_mode = #tpu.pipeline_mode<synchronous>, transform_indices = @transform_17, window_bounds = array<i64: 1, 1>}, {transform_indices = @transform_18, window_bounds = array<i64: 2, 1>}]} {
    %c0 = arith.constant 0 : index
    %c0_0 = arith.constant 0 : index
    %c0_1 = arith.constant 0 : index
    %0 = vector.load %arg1[%c0, %c0_0, %c0_1] : memref<2x16x1xf32, #tpu.memory_space<vmem>>, vector<2x16x1xf32>
    %1 = tpu.iota {dimensions = array<i32: 1>} : vector<2x16x128xi32>
    %c1_i32 = arith.constant 1 : i32
    %2 = vector.broadcast %c1_i32 : i32 to vector<2x16x128xi32>
    %3 = arith.cmpi sge, %1, %2 : vector<2x16x128xi32>
    %4 = tpu.iota {dimensions = array<i32: 1>} : vector<2x16x64xi32>
    %c2_i32 = arith.constant 2 : i32
    %5 = vector.broadcast %c2_i32 : i32 to vector<2x16x64xi32>
    %6 = arith.cmpi sge, %4, %5 : vector<2x16x64xi32>
    %7 = tpu.iota {dimensions = array<i32: 1>} : vector<2x16x32xi32>
    %c4_i32 = arith.constant 4 : i32
    %8 = vector.broadcast %c4_i32 : i32 to vector<2x16x32xi32>
    %9 = arith.cmpi sge, %7, %8 : vector<2x16x32xi32>
    %10 = vector.shape_cast %0 : vector<2x16x1xf32> to vector<2x16x1xf32>
    %11 = vector.broadcast %10 : vector<2x16x1xf32> to vector<2x16x128xf32>
    %c0_2 = arith.constant 0 : index
    %c0_3 = arith.constant 0 : index
    %c0_4 = arith.constant 0 : index
    %12 = vector.load %arg2[%c0_2, %c0_3, %c0_4] : memref<3x1x128xf32, #tpu.memory_space<vmem>>, vector<1x1x128xf32>
    %13 = vector.shape_cast %12 : vector<1x1x128xf32> to vector<1x128xf32>
    %14 = vector.shape_cast %13 : vector<1x128xf32> to vector<1x1x128xf32>
    %15 = vector.broadcast %14 : vector<1x1x128xf32> to vector<2x16x128xf32>
    %16 = arith.mulf %11, %15 : vector<2x16x128xf32>
    %17 = vector.shape_cast %16 : vector<2x16x128xf32> to vector<32x128xf32>
    %c1_i32_5 = arith.constant 1 : i32
    %18 = tpu.dynamic_rotate %17 by %c1_i32_5 dim 0 : vector<32x128xf32>, i32 -> vector<32x128xf32>
    %19 = vector.shape_cast %18 : vector<32x128xf32> to vector<2x16x128xf32>
    %cst = arith.constant 0.000000e+00 : f32
    %20 = vector.broadcast %cst : f32 to vector<2x16x128xf32>
    %21 = arith.select %3, %19, %20 : vector<2x16x128xi1>, vector<2x16x128xf32>
    %c1 = arith.constant 1 : index
    %c0_6 = arith.constant 0 : index
    %c0_7 = arith.constant 0 : index
    %22 = vector.load %arg2[%c1, %c0_6, %c0_7] : memref<3x1x128xf32, #tpu.memory_space<vmem>>, vector<1x1x128xf32>
    %23 = vector.shape_cast %22 : vector<1x1x128xf32> to vector<1x128xf32>
    %24 = vector.shape_cast %23 : vector<1x128xf32> to vector<1x1x128xf32>
    %25 = vector.broadcast %24 : vector<1x1x128xf32> to vector<2x16x128xf32>
    %26 = arith.mulf %11, %25 : vector<2x16x128xf32>
    %27 = arith.addf %21, %26 : vector<2x16x128xf32>
    %c0_8 = arith.constant 0 : index
    %c0_9 = arith.constant 0 : index
    %c0_10 = arith.constant 0 : index
    %28 = vector.load %arg3[%c0_8, %c0_9, %c0_10] : memref<3x1x128xf32, #tpu.memory_space<vmem>>, vector<1x1x128xf32>
    %29 = vector.shape_cast %28 : vector<1x1x128xf32> to vector<1x128xf32>
    %30 = vector.shape_cast %29 : vector<1x128xf32> to vector<1x1x128xf32>
    %31 = vector.broadcast %30 : vector<1x1x128xf32> to vector<2x16x128xf32>
    %32 = arith.addf %27, %31 : vector<2x16x128xf32>
    %cst_11 = arith.constant 0.000000e+00 : f32
    %33 = vector.broadcast %cst_11 : f32 to vector<2x16x128xf32>
    %34 = arith.maximumf %32, %33 : vector<2x16x128xf32>
    %c2 = arith.constant 2 : index
    %c0_12 = arith.constant 0 : index
    %c0_13 = arith.constant 0 : index
    %35 = vector.load %arg2[%c2, %c0_12, %c0_13] : memref<3x1x128xf32, #tpu.memory_space<vmem>>, vector<1x1x128xf32>
    %36 = vector.shape_cast %35 : vector<1x1x128xf32> to vector<1x128xf32>
    %37 = vector.shape_cast %36 : vector<1x128xf32> to vector<1x1x128xf32>
    %38 = vector.broadcast %37 : vector<1x1x128xf32> to vector<2x16x128xf32>
    %39 = arith.mulf %11, %38 : vector<2x16x128xf32>
    %c2_14 = arith.constant 2 : index
    %c0_15 = arith.constant 0 : index
    %c0_16 = arith.constant 0 : index
    %40 = vector.load %arg3[%c2_14, %c0_15, %c0_16] : memref<3x1x128xf32, #tpu.memory_space<vmem>>, vector<1x1x128xf32>
    %41 = vector.shape_cast %40 : vector<1x1x128xf32> to vector<1x128xf32>
    %42 = vector.shape_cast %41 : vector<1x128xf32> to vector<1x1x128xf32>
    %43 = vector.broadcast %42 : vector<1x1x128xf32> to vector<2x16x128xf32>
    %44 = arith.addf %39, %43 : vector<2x16x128xf32>
    %c0_17 = arith.constant 0 : index
    %c0_18 = arith.constant 0 : index
    %c0_19 = arith.constant 0 : index
    %45 = vector.load %arg4[%c0_17, %c0_18, %c0_19] : memref<2x128x128xbf16, #tpu.memory_space<vmem>>, vector<1x128x128xbf16>
    %46 = vector.shape_cast %45 : vector<1x128x128xbf16> to vector<128x128xbf16>
    %47 = vector.shape_cast %34 : vector<2x16x128xf32> to vector<32x128xf32>
    %48 = arith.truncf %47 : vector<32x128xf32> to vector<32x128xbf16>
    %cst_20 = arith.constant dense<0.000000e+00> : vector<32x128xf32>
    %49 = tpu.matmul %48, %46, %cst_20 {dimension_numbers = #tpu.dot_dimension_numbers<[1], [0], [0], [1], [0, 0, 1, 1], [], []>} : vector<32x128xbf16>, vector<128x128xbf16>, vector<32x128xf32> -> vector<32x128xf32>
    %50 = vector.shape_cast %49 : vector<32x128xf32> to vector<2x16x128xf32>
    %51 = vector.shape_cast %50 : vector<2x16x128xf32> to vector<32x128xf32>
    %c1_i32_21 = arith.constant 1 : i32
    %52 = tpu.dynamic_rotate %51 by %c1_i32_21 dim 0 : vector<32x128xf32>, i32 -> vector<32x128xf32>
    %53 = vector.shape_cast %52 : vector<32x128xf32> to vector<2x16x128xf32>
    %cst_22 = arith.constant 0.000000e+00 : f32
    %54 = vector.broadcast %cst_22 : f32 to vector<2x16x128xf32>
    %55 = arith.select %3, %53, %54 : vector<2x16x128xi1>, vector<2x16x128xf32>
    %c1_23 = arith.constant 1 : index
    %c0_24 = arith.constant 0 : index
    %c0_25 = arith.constant 0 : index
    %56 = vector.load %arg4[%c1_23, %c0_24, %c0_25] : memref<2x128x128xbf16, #tpu.memory_space<vmem>>, vector<1x128x128xbf16>
    %57 = vector.shape_cast %56 : vector<1x128x128xbf16> to vector<128x128xbf16>
    %58 = vector.shape_cast %34 : vector<2x16x128xf32> to vector<32x128xf32>
    %59 = arith.truncf %58 : vector<32x128xf32> to vector<32x128xbf16>
    %cst_26 = arith.constant dense<0.000000e+00> : vector<32x128xf32>
    %60 = tpu.matmul %59, %57, %cst_26 {dimension_numbers = #tpu.dot_dimension_numbers<[1], [0], [0], [1], [0, 0, 1, 1], [], []>} : vector<32x128xbf16>, vector<128x128xbf16>, vector<32x128xf32> -> vector<32x128xf32>
    %61 = vector.shape_cast %60 : vector<32x128xf32> to vector<2x16x128xf32>
    %62 = arith.addf %55, %61 : vector<2x16x128xf32>
    %c1_27 = arith.constant 1 : index
    %c0_28 = arith.constant 0 : index
    %c0_29 = arith.constant 0 : index
    %63 = vector.load %arg3[%c1_27, %c0_28, %c0_29] : memref<3x1x128xf32, #tpu.memory_space<vmem>>, vector<1x1x128xf32>
    %64 = vector.shape_cast %63 : vector<1x1x128xf32> to vector<1x128xf32>
    %65 = vector.shape_cast %64 : vector<1x128xf32> to vector<1x1x128xf32>
    %66 = vector.broadcast %65 : vector<1x1x128xf32> to vector<2x16x128xf32>
    %67 = arith.addf %62, %66 : vector<2x16x128xf32>
    %cst_30 = arith.constant 0.000000e+00 : f32
    %68 = vector.broadcast %cst_30 : f32 to vector<2x16x128xf32>
    %69 = arith.maximumf %67, %68 : vector<2x16x128xf32>
    %70 = arith.addf %69, %44 : vector<2x16x128xf32>
    %cst_31 = arith.constant 0.000000e+00 : f32
    %71 = vector.broadcast %cst_31 : f32 to vector<2x16x128xf32>
    %72 = arith.maximumf %70, %71 : vector<2x16x128xf32>
    %c0_32 = arith.constant 0 : index
    %c0_33 = arith.constant 0 : index
    %c0_34 = arith.constant 0 : index
    %73 = vector.load %arg5[%c0_32, %c0_33, %c0_34] : memref<2x128x64xbf16, #tpu.memory_space<vmem>>, vector<1x128x64xbf16>
    %74 = vector.shape_cast %73 : vector<1x128x64xbf16> to vector<128x64xbf16>
    %75 = vector.shape_cast %72 : vector<2x16x128xf32> to vector<32x128xf32>
    %76 = arith.truncf %75 : vector<32x128xf32> to vector<32x128xbf16>
    %cst_35 = arith.constant dense<0.000000e+00> : vector<32x64xf32>
    %77 = tpu.matmul %76, %74, %cst_35 {dimension_numbers = #tpu.dot_dimension_numbers<[1], [0], [0], [1], [0, 0, 1, 1], [], []>} : vector<32x128xbf16>, vector<128x64xbf16>, vector<32x64xf32> -> vector<32x64xf32>
    %78 = vector.shape_cast %77 : vector<32x64xf32> to vector<2x16x64xf32>
    %79 = vector.shape_cast %78 : vector<2x16x64xf32> to vector<32x64xf32>
    %c2_i32_36 = arith.constant 2 : i32
    %80 = tpu.dynamic_rotate %79 by %c2_i32_36 dim 0 : vector<32x64xf32>, i32 -> vector<32x64xf32>
    %81 = vector.shape_cast %80 : vector<32x64xf32> to vector<2x16x64xf32>
    %cst_37 = arith.constant 0.000000e+00 : f32
    %82 = vector.broadcast %cst_37 : f32 to vector<2x16x64xf32>
    %83 = arith.select %6, %81, %82 : vector<2x16x64xi1>, vector<2x16x64xf32>
    %c1_38 = arith.constant 1 : index
    %c0_39 = arith.constant 0 : index
    %c0_40 = arith.constant 0 : index
    %84 = vector.load %arg5[%c1_38, %c0_39, %c0_40] : memref<2x128x64xbf16, #tpu.memory_space<vmem>>, vector<1x128x64xbf16>
    %85 = vector.shape_cast %84 : vector<1x128x64xbf16> to vector<128x64xbf16>
    %86 = vector.shape_cast %72 : vector<2x16x128xf32> to vector<32x128xf32>
    %87 = arith.truncf %86 : vector<32x128xf32> to vector<32x128xbf16>
    %cst_41 = arith.constant dense<0.000000e+00> : vector<32x64xf32>
    %88 = tpu.matmul %87, %85, %cst_41 {dimension_numbers = #tpu.dot_dimension_numbers<[1], [0], [0], [1], [0, 0, 1, 1], [], []>} : vector<32x128xbf16>, vector<128x64xbf16>, vector<32x64xf32> -> vector<32x64xf32>
    %89 = vector.shape_cast %88 : vector<32x64xf32> to vector<2x16x64xf32>
    %90 = arith.addf %83, %89 : vector<2x16x64xf32>
    %c0_42 = arith.constant 0 : index
    %c0_43 = arith.constant 0 : index
    %c0_44 = arith.constant 0 : index
    %91 = vector.load %arg8[%c0_42, %c0_43, %c0_44] : memref<3x1x64xf32, #tpu.memory_space<vmem>>, vector<1x1x64xf32>
    %92 = vector.shape_cast %91 : vector<1x1x64xf32> to vector<1x64xf32>
    %93 = vector.shape_cast %92 : vector<1x64xf32> to vector<1x1x64xf32>
    %94 = vector.broadcast %93 : vector<1x1x64xf32> to vector<2x16x64xf32>
    %95 = arith.addf %90, %94 : vector<2x16x64xf32>
    %cst_45 = arith.constant 0.000000e+00 : f32
    %96 = vector.broadcast %cst_45 : f32 to vector<2x16x64xf32>
    %97 = arith.maximumf %95, %96 : vector<2x16x64xf32>
    %c0_46 = arith.constant 0 : index
    %c0_47 = arith.constant 0 : index
    %c0_48 = arith.constant 0 : index
    %98 = vector.load %arg6[%c0_46, %c0_47, %c0_48] : memref<2x64x64xbf16, #tpu.memory_space<vmem>>, vector<1x64x64xbf16>
    %99 = vector.shape_cast %98 : vector<1x64x64xbf16> to vector<64x64xbf16>
    %100 = vector.shape_cast %97 : vector<2x16x64xf32> to vector<32x64xf32>
    %101 = arith.truncf %100 : vector<32x64xf32> to vector<32x64xbf16>
    %cst_49 = arith.constant dense<0.000000e+00> : vector<32x64xf32>
    %102 = tpu.matmul %101, %99, %cst_49 {dimension_numbers = #tpu.dot_dimension_numbers<[1], [0], [0], [1], [0, 0, 1, 1], [], []>} : vector<32x64xbf16>, vector<64x64xbf16>, vector<32x64xf32> -> vector<32x64xf32>
    %103 = vector.shape_cast %102 : vector<32x64xf32> to vector<2x16x64xf32>
    %104 = vector.shape_cast %103 : vector<2x16x64xf32> to vector<32x64xf32>
    %c2_i32_50 = arith.constant 2 : i32
    %105 = tpu.dynamic_rotate %104 by %c2_i32_50 dim 0 : vector<32x64xf32>, i32 -> vector<32x64xf32>
    %106 = vector.shape_cast %105 : vector<32x64xf32> to vector<2x16x64xf32>
    %cst_51 = arith.constant 0.000000e+00 : f32
    %107 = vector.broadcast %cst_51 : f32 to vector<2x16x64xf32>
    %108 = arith.select %6, %106, %107 : vector<2x16x64xi1>, vector<2x16x64xf32>
    %c1_52 = arith.constant 1 : index
    %c0_53 = arith.constant 0 : index
    %c0_54 = arith.constant 0 : index
    %109 = vector.load %arg6[%c1_52, %c0_53, %c0_54] : memref<2x64x64xbf16, #tpu.memory_space<vmem>>, vector<1x64x64xbf16>
    %110 = vector.shape_cast %109 : vector<1x64x64xbf16> to vector<64x64xbf16>
    %111 = vector.shape_cast %97 : vector<2x16x64xf32> to vector<32x64xf32>
    %112 = arith.truncf %111 : vector<32x64xf32> to vector<32x64xbf16>
    %cst_55 = arith.constant dense<0.000000e+00> : vector<32x64xf32>
    %113 = tpu.matmul %112, %110, %cst_55 {dimension_numbers = #tpu.dot_dimension_numbers<[1], [0], [0], [1], [0, 0, 1, 1], [], []>} : vector<32x64xbf16>, vector<64x64xbf16>, vector<32x64xf32> -> vector<32x64xf32>
    %114 = vector.shape_cast %113 : vector<32x64xf32> to vector<2x16x64xf32>
    %115 = arith.addf %108, %114 : vector<2x16x64xf32>
    %c1_56 = arith.constant 1 : index
    %c0_57 = arith.constant 0 : index
    %c0_58 = arith.constant 0 : index
    %116 = vector.load %arg8[%c1_56, %c0_57, %c0_58] : memref<3x1x64xf32, #tpu.memory_space<vmem>>, vector<1x1x64xf32>
    %117 = vector.shape_cast %116 : vector<1x1x64xf32> to vector<1x64xf32>
    %118 = vector.shape_cast %117 : vector<1x64xf32> to vector<1x1x64xf32>
    %119 = vector.broadcast %118 : vector<1x1x64xf32> to vector<2x16x64xf32>
    %120 = arith.addf %115, %119 : vector<2x16x64xf32>
    %cst_59 = arith.constant 0.000000e+00 : f32
    %121 = vector.broadcast %cst_59 : f32 to vector<2x16x64xf32>
    %122 = arith.maximumf %120, %121 : vector<2x16x64xf32>
    %c0_60 = arith.constant 0 : index
    %c0_61 = arith.constant 0 : index
    %123 = vector.load %arg7[%c0_60, %c0_61] : memref<128x64xbf16, #tpu.memory_space<vmem>>, vector<128x64xbf16>
    %124 = vector.shape_cast %72 : vector<2x16x128xf32> to vector<32x128xf32>
    %125 = arith.truncf %124 : vector<32x128xf32> to vector<32x128xbf16>
    %cst_62 = arith.constant dense<0.000000e+00> : vector<32x64xf32>
    %126 = tpu.matmul %125, %123, %cst_62 {dimension_numbers = #tpu.dot_dimension_numbers<[1], [0], [0], [1], [0, 0, 1, 1], [], []>} : vector<32x128xbf16>, vector<128x64xbf16>, vector<32x64xf32> -> vector<32x64xf32>
    %127 = vector.shape_cast %126 : vector<32x64xf32> to vector<2x16x64xf32>
    %c2_63 = arith.constant 2 : index
    %c0_64 = arith.constant 0 : index
    %c0_65 = arith.constant 0 : index
    %128 = vector.load %arg8[%c2_63, %c0_64, %c0_65] : memref<3x1x64xf32, #tpu.memory_space<vmem>>, vector<1x1x64xf32>
    %129 = vector.shape_cast %128 : vector<1x1x64xf32> to vector<1x64xf32>
    %130 = vector.shape_cast %129 : vector<1x64xf32> to vector<1x1x64xf32>
    %131 = vector.broadcast %130 : vector<1x1x64xf32> to vector<2x16x64xf32>
    %132 = arith.addf %127, %131 : vector<2x16x64xf32>
    %133 = arith.addf %122, %132 : vector<2x16x64xf32>
    %cst_66 = arith.constant 0.000000e+00 : f32
    %134 = vector.broadcast %cst_66 : f32 to vector<2x16x64xf32>
    %135 = arith.maximumf %133, %134 : vector<2x16x64xf32>
    %c0_67 = arith.constant 0 : index
    %c0_68 = arith.constant 0 : index
    %c0_69 = arith.constant 0 : index
    %136 = vector.load %arg9[%c0_67, %c0_68, %c0_69] : memref<2x64x32xbf16, #tpu.memory_space<vmem>>, vector<1x64x32xbf16>
    %137 = vector.shape_cast %136 : vector<1x64x32xbf16> to vector<64x32xbf16>
    %138 = vector.shape_cast %135 : vector<2x16x64xf32> to vector<32x64xf32>
    %139 = arith.truncf %138 : vector<32x64xf32> to vector<32x64xbf16>
    %cst_70 = arith.constant dense<0.000000e+00> : vector<32x32xf32>
    %140 = tpu.matmul %139, %137, %cst_70 {dimension_numbers = #tpu.dot_dimension_numbers<[1], [0], [0], [1], [0, 0, 1, 1], [], []>} : vector<32x64xbf16>, vector<64x32xbf16>, vector<32x32xf32> -> vector<32x32xf32>
    %141 = vector.shape_cast %140 : vector<32x32xf32> to vector<2x16x32xf32>
    %142 = vector.shape_cast %141 : vector<2x16x32xf32> to vector<32x32xf32>
    %c4_i32_71 = arith.constant 4 : i32
    %143 = tpu.dynamic_rotate %142 by %c4_i32_71 dim 0 : vector<32x32xf32>, i32 -> vector<32x32xf32>
    %144 = vector.shape_cast %143 : vector<32x32xf32> to vector<2x16x32xf32>
    %cst_72 = arith.constant 0.000000e+00 : f32
    %145 = vector.broadcast %cst_72 : f32 to vector<2x16x32xf32>
    %146 = arith.select %9, %144, %145 : vector<2x16x32xi1>, vector<2x16x32xf32>
    %c1_73 = arith.constant 1 : index
    %c0_74 = arith.constant 0 : index
    %c0_75 = arith.constant 0 : index
    %147 = vector.load %arg9[%c1_73, %c0_74, %c0_75] : memref<2x64x32xbf16, #tpu.memory_space<vmem>>, vector<1x64x32xbf16>
    %148 = vector.shape_cast %147 : vector<1x64x32xbf16> to vector<64x32xbf16>
    %149 = vector.shape_cast %135 : vector<2x16x64xf32> to vector<32x64xf32>
    %150 = arith.truncf %149 : vector<32x64xf32> to vector<32x64xbf16>
    %cst_76 = arith.constant dense<0.000000e+00> : vector<32x32xf32>
    %151 = tpu.matmul %150, %148, %cst_76 {dimension_numbers = #tpu.dot_dimension_numbers<[1], [0], [0], [1], [0, 0, 1, 1], [], []>} : vector<32x64xbf16>, vector<64x32xbf16>, vector<32x32xf32> -> vector<32x32xf32>
    %152 = vector.shape_cast %151 : vector<32x32xf32> to vector<2x16x32xf32>
    %153 = arith.addf %146, %152 : vector<2x16x32xf32>
    %c0_77 = arith.constant 0 : index
    %c0_78 = arith.constant 0 : index
    %c0_79 = arith.constant 0 : index
    %154 = vector.load %arg12[%c0_77, %c0_78, %c0_79] : memref<3x1x32xf32, #tpu.memory_space<vmem>>, vector<1x1x32xf32>
    %155 = vector.shape_cast %154 : vector<1x1x32xf32> to vector<1x32xf32>
    %156 = vector.shape_cast %155 : vector<1x32xf32> to vector<1x1x32xf32>
    %157 = vector.broadcast %156 : vector<1x1x32xf32> to vector<2x16x32xf32>
    %158 = arith.addf %153, %157 : vector<2x16x32xf32>
    %cst_80 = arith.constant 0.000000e+00 : f32
    %159 = vector.broadcast %cst_80 : f32 to vector<2x16x32xf32>
    %160 = arith.maximumf %158, %159 : vector<2x16x32xf32>
    %c0_81 = arith.constant 0 : index
    %c0_82 = arith.constant 0 : index
    %c0_83 = arith.constant 0 : index
    %161 = vector.load %arg10[%c0_81, %c0_82, %c0_83] : memref<2x32x32xbf16, #tpu.memory_space<vmem>>, vector<1x32x32xbf16>
    %162 = vector.shape_cast %161 : vector<1x32x32xbf16> to vector<32x32xbf16>
    %163 = vector.shape_cast %160 : vector<2x16x32xf32> to vector<32x32xf32>
    %164 = arith.truncf %163 : vector<32x32xf32> to vector<32x32xbf16>
    %cst_84 = arith.constant dense<0.000000e+00> : vector<32x32xf32>
    %165 = tpu.matmul %164, %162, %cst_84 {dimension_numbers = #tpu.dot_dimension_numbers<[1], [0], [0], [1], [0, 0, 1, 1], [], []>} : vector<32x32xbf16>, vector<32x32xbf16>, vector<32x32xf32> -> vector<32x32xf32>
    %166 = vector.shape_cast %165 : vector<32x32xf32> to vector<2x16x32xf32>
    %167 = vector.shape_cast %166 : vector<2x16x32xf32> to vector<32x32xf32>
    %c4_i32_85 = arith.constant 4 : i32
    %168 = tpu.dynamic_rotate %167 by %c4_i32_85 dim 0 : vector<32x32xf32>, i32 -> vector<32x32xf32>
    %169 = vector.shape_cast %168 : vector<32x32xf32> to vector<2x16x32xf32>
    %cst_86 = arith.constant 0.000000e+00 : f32
    %170 = vector.broadcast %cst_86 : f32 to vector<2x16x32xf32>
    %171 = arith.select %9, %169, %170 : vector<2x16x32xi1>, vector<2x16x32xf32>
    %c1_87 = arith.constant 1 : index
    %c0_88 = arith.constant 0 : index
    %c0_89 = arith.constant 0 : index
    %172 = vector.load %arg10[%c1_87, %c0_88, %c0_89] : memref<2x32x32xbf16, #tpu.memory_space<vmem>>, vector<1x32x32xbf16>
    %173 = vector.shape_cast %172 : vector<1x32x32xbf16> to vector<32x32xbf16>
    %174 = vector.shape_cast %160 : vector<2x16x32xf32> to vector<32x32xf32>
    %175 = arith.truncf %174 : vector<32x32xf32> to vector<32x32xbf16>
    %cst_90 = arith.constant dense<0.000000e+00> : vector<32x32xf32>
    %176 = tpu.matmul %175, %173, %cst_90 {dimension_numbers = #tpu.dot_dimension_numbers<[1], [0], [0], [1], [0, 0, 1, 1], [], []>} : vector<32x32xbf16>, vector<32x32xbf16>, vector<32x32xf32> -> vector<32x32xf32>
    %177 = vector.shape_cast %176 : vector<32x32xf32> to vector<2x16x32xf32>
    %178 = arith.addf %171, %177 : vector<2x16x32xf32>
    %c1_91 = arith.constant 1 : index
    %c0_92 = arith.constant 0 : index
    %c0_93 = arith.constant 0 : index
    %179 = vector.load %arg12[%c1_91, %c0_92, %c0_93] : memref<3x1x32xf32, #tpu.memory_space<vmem>>, vector<1x1x32xf32>
    %180 = vector.shape_cast %179 : vector<1x1x32xf32> to vector<1x32xf32>
    %181 = vector.shape_cast %180 : vector<1x32xf32> to vector<1x1x32xf32>
    %182 = vector.broadcast %181 : vector<1x1x32xf32> to vector<2x16x32xf32>
    %183 = arith.addf %178, %182 : vector<2x16x32xf32>
    %cst_94 = arith.constant 0.000000e+00 : f32
    %184 = vector.broadcast %cst_94 : f32 to vector<2x16x32xf32>
    %185 = arith.maximumf %183, %184 : vector<2x16x32xf32>
    %c0_95 = arith.constant 0 : index
    %c0_96 = arith.constant 0 : index
    %186 = vector.load %arg11[%c0_95, %c0_96] : memref<64x32xbf16, #tpu.memory_space<vmem>>, vector<64x32xbf16>
    %187 = vector.shape_cast %135 : vector<2x16x64xf32> to vector<32x64xf32>
    %188 = arith.truncf %187 : vector<32x64xf32> to vector<32x64xbf16>
    %cst_97 = arith.constant dense<0.000000e+00> : vector<32x32xf32>
    %189 = tpu.matmul %188, %186, %cst_97 {dimension_numbers = #tpu.dot_dimension_numbers<[1], [0], [0], [1], [0, 0, 1, 1], [], []>} : vector<32x64xbf16>, vector<64x32xbf16>, vector<32x32xf32> -> vector<32x32xf32>
    %190 = vector.shape_cast %189 : vector<32x32xf32> to vector<2x16x32xf32>
    %c2_98 = arith.constant 2 : index
    %c0_99 = arith.constant 0 : index
    %c0_100 = arith.constant 0 : index
    %191 = vector.load %arg12[%c2_98, %c0_99, %c0_100] : memref<3x1x32xf32, #tpu.memory_space<vmem>>, vector<1x1x32xf32>
    %192 = vector.shape_cast %191 : vector<1x1x32xf32> to vector<1x32xf32>
    %193 = vector.shape_cast %192 : vector<1x32xf32> to vector<1x1x32xf32>
    %194 = vector.broadcast %193 : vector<1x1x32xf32> to vector<2x16x32xf32>
    %195 = arith.addf %190, %194 : vector<2x16x32xf32>
    %196 = arith.addf %185, %195 : vector<2x16x32xf32>
    %cst_101 = arith.constant 0.000000e+00 : f32
    %197 = vector.broadcast %cst_101 : f32 to vector<2x16x32xf32>
    %198 = arith.maximumf %196, %197 : vector<2x16x32xf32>
    %cst_102 = arith.constant dense<0.000000e+00> : vector<2x32xf32>
    %199 = vector.multi_reduction <add>, %198, %cst_102 [1] : vector<2x16x32xf32> to vector<2x32xf32>
    %cst_103 = arith.constant 6.250000e-02 : f32
    %200 = vector.broadcast %cst_103 : f32 to vector<2x32xf32>
    %201 = arith.mulf %199, %200 : vector<2x32xf32>
    %c0_104 = arith.constant 0 : index
    %c0_105 = arith.constant 0 : index
    %202 = vector.load %arg13[%c0_104, %c0_105] : memref<32x2xf32, #tpu.memory_space<vmem>>, vector<32x2xf32>
    %cst_106 = arith.constant dense<0.000000e+00> : vector<2x2xf32>
    %203 = tpu.matmul %201, %202, %cst_106 {dimension_numbers = #tpu.dot_dimension_numbers<[1], [0], [0], [1], [0, 0, 1, 1], [], []>} : vector<2x32xf32>, vector<32x2xf32>, vector<2x2xf32> -> vector<2x2xf32>
    %cst_107 = arith.constant 0.000000e+00 : f32
    %204 = vector.broadcast %cst_107 : f32 to vector<2x2xf32>
    %205 = arith.maximumf %203, %204 : vector<2x2xf32>
    %c0_108 = arith.constant 0 : index
    %c0_109 = arith.constant 0 : index
    %206 = vector.load %arg14[%c0_108, %c0_109] : memref<2x32xf32, #tpu.memory_space<vmem>>, vector<2x32xf32>
    %cst_110 = arith.constant dense<0.000000e+00> : vector<2x32xf32>
    %207 = tpu.matmul %205, %206, %cst_110 {dimension_numbers = #tpu.dot_dimension_numbers<[1], [0], [0], [1], [0, 0, 1, 1], [], []>} : vector<2x2xf32>, vector<2x32xf32>, vector<2x32xf32> -> vector<2x32xf32>
    %208 = arith.negf %207 : vector<2x32xf32>
    %209 = math.exp %208 : vector<2x32xf32>
    %cst_111 = arith.constant 1.000000e+00 : f32
    %210 = vector.broadcast %cst_111 : f32 to vector<2x32xf32>
    %211 = arith.addf %210, %209 : vector<2x32xf32>
    %212 = arith.divf %210, %211 : vector<2x32xf32>
    %cst_112 = arith.constant 1.000000e+00 : f32
    %213 = vector.broadcast %cst_112 : f32 to vector<2x32xf32>
    %214 = arith.addf %213, %212 : vector<2x32xf32>
    %215 = arith.mulf %201, %214 : vector<2x32xf32>
    %c0_113 = arith.constant 0 : index
    %c0_114 = arith.constant 0 : index
    %216 = vector.load %arg15[%c0_113, %c0_114] : memref<32x32xf32, #tpu.memory_space<vmem>>, vector<32x32xf32>
    %cst_115 = arith.constant dense<0.000000e+00> : vector<2x32xf32>
    %217 = tpu.matmul %215, %216, %cst_115 {dimension_numbers = #tpu.dot_dimension_numbers<[1], [0], [0], [1], [0, 0, 1, 1], [], []>} : vector<2x32xf32>, vector<32x32xf32>, vector<2x32xf32> -> vector<2x32xf32>
    %c0_116 = arith.constant 0 : index
    %c0_117 = arith.constant 0 : index
    %218 = vector.load %arg16[%c0_116, %c0_117] : memref<1x32xf32, #tpu.memory_space<vmem>>, vector<1x32xf32>
    %219 = vector.broadcast %218 : vector<1x32xf32> to vector<2x32xf32>
    %220 = arith.addf %217, %219 : vector<2x32xf32>
    %cst_118 = arith.constant 0.000000e+00 : f32
    %221 = vector.broadcast %cst_118 : f32 to vector<2x32xf32>
    %222 = arith.maximumf %220, %221 : vector<2x32xf32>
    %c0_119 = arith.constant 0 : index
    %c0_120 = arith.constant 0 : index
    %223 = vector.load %arg17[%c0_119, %c0_120] : memref<32x1xf32, #tpu.memory_space<vmem>>, vector<32x1xf32>
    %cst_121 = arith.constant dense<0.000000e+00> : vector<2x1xf32>
    %224 = tpu.matmul %222, %223, %cst_121 {dimension_numbers = #tpu.dot_dimension_numbers<[1], [0], [0], [1], [0, 0, 1, 1], [], []>} : vector<2x32xf32>, vector<32x1xf32>, vector<2x1xf32> -> vector<2x1xf32>
    %c0_122 = arith.constant 0 : index
    %c0_123 = arith.constant 0 : index
    %225 = vector.load %arg18[%c0_122, %c0_123] : memref<1x1xf32, #tpu.memory_space<vmem>>, vector<1x1xf32>
    %226 = vector.broadcast %225 : vector<1x1xf32> to vector<2x1xf32>
    %227 = arith.addf %224, %226 : vector<2x1xf32>
    %c0_124 = arith.constant 0 : index
    %c0_125 = arith.constant 0 : index
    %228 = vector.load %arg19[%c0_124, %c0_125] : memref<2x1xf32, #tpu.memory_space<vmem>>, vector<2x1xf32>
    tpu.vector_store %arg19[%c0_124, %c0_125], %227 {strides = array<i32>} : memref<2x1xf32, #tpu.memory_space<vmem>>, vector<2x1xf32>,
    return
  }
  func.func @transform_0(%arg0: i32) -> (i32, i32, i32) {
    %c0_i32 = arith.constant 0 : i32
    %c0_i32_0 = arith.constant 0 : i32
    %c0_i32_1 = arith.constant 0 : i32
    return %arg0, %c0_i32, %c0_i32_0 : i32, i32, i32
  }
  func.func @transform_1(%arg0: i32) -> (i32, i32, i32) {
    %c0_i32 = arith.constant 0 : i32
    %c0_i32_0 = arith.constant 0 : i32
    %c0_i32_1 = arith.constant 0 : i32
    %c0_i32_2 = arith.constant 0 : i32
    return %c0_i32, %c0_i32_0, %c0_i32_1 : i32, i32, i32
  }
  func.func @transform_2(%arg0: i32) -> (i32, i32, i32) {
    %c0_i32 = arith.constant 0 : i32
    %c0_i32_0 = arith.constant 0 : i32
    %c0_i32_1 = arith.constant 0 : i32
    %c0_i32_2 = arith.constant 0 : i32
    return %c0_i32, %c0_i32_0, %c0_i32_1 : i32, i32, i32
  }
  func.func @transform_3(%arg0: i32) -> (i32, i32, i32) {
    %c0_i32 = arith.constant 0 : i32
    %c0_i32_0 = arith.constant 0 : i32
    %c0_i32_1 = arith.constant 0 : i32
    %c0_i32_2 = arith.constant 0 : i32
    return %c0_i32, %c0_i32_0, %c0_i32_1 : i32, i32, i32
  }
  func.func @transform_4(%arg0: i32) -> (i32, i32, i32) {
    %c0_i32 = arith.constant 0 : i32
    %c0_i32_0 = arith.constant 0 : i32
    %c0_i32_1 = arith.constant 0 : i32
    %c0_i32_2 = arith.constant 0 : i32
    return %c0_i32, %c0_i32_0, %c0_i32_1 : i32, i32, i32
  }
  func.func @transform_5(%arg0: i32) -> (i32, i32, i32) {
    %c0_i32 = arith.constant 0 : i32
    %c0_i32_0 = arith.constant 0 : i32
    %c0_i32_1 = arith.constant 0 : i32
    %c0_i32_2 = arith.constant 0 : i32
    return %c0_i32, %c0_i32_0, %c0_i32_1 : i32, i32, i32
  }
  func.func @transform_6(%arg0: i32) -> (i32, i32) {
    %c0_i32 = arith.constant 0 : i32
    %c0_i32_0 = arith.constant 0 : i32
    %c0_i32_1 = arith.constant 0 : i32
    return %c0_i32, %c0_i32_0 : i32, i32
  }
  func.func @transform_7(%arg0: i32) -> (i32, i32, i32) {
    %c0_i32 = arith.constant 0 : i32
    %c0_i32_0 = arith.constant 0 : i32
    %c0_i32_1 = arith.constant 0 : i32
    %c0_i32_2 = arith.constant 0 : i32
    return %c0_i32, %c0_i32_0, %c0_i32_1 : i32, i32, i32
  }
  func.func @transform_8(%arg0: i32) -> (i32, i32, i32) {
    %c0_i32 = arith.constant 0 : i32
    %c0_i32_0 = arith.constant 0 : i32
    %c0_i32_1 = arith.constant 0 : i32
    %c0_i32_2 = arith.constant 0 : i32
    return %c0_i32, %c0_i32_0, %c0_i32_1 : i32, i32, i32
  }
  func.func @transform_9(%arg0: i32) -> (i32, i32, i32) {
    %c0_i32 = arith.constant 0 : i32
    %c0_i32_0 = arith.constant 0 : i32
    %c0_i32_1 = arith.constant 0 : i32
    %c0_i32_2 = arith.constant 0 : i32
    return %c0_i32, %c0_i32_0, %c0_i32_1 : i32, i32, i32
  }
  func.func @transform_10(%arg0: i32) -> (i32, i32) {
    %c0_i32 = arith.constant 0 : i32
    %c0_i32_0 = arith.constant 0 : i32
    %c0_i32_1 = arith.constant 0 : i32
    return %c0_i32, %c0_i32_0 : i32, i32
  }
  func.func @transform_11(%arg0: i32) -> (i32, i32, i32) {
    %c0_i32 = arith.constant 0 : i32
    %c0_i32_0 = arith.constant 0 : i32
    %c0_i32_1 = arith.constant 0 : i32
    %c0_i32_2 = arith.constant 0 : i32
    return %c0_i32, %c0_i32_0, %c0_i32_1 : i32, i32, i32
  }
  func.func @transform_12(%arg0: i32) -> (i32, i32) {
    %c0_i32 = arith.constant 0 : i32
    %c0_i32_0 = arith.constant 0 : i32
    %c0_i32_1 = arith.constant 0 : i32
    return %c0_i32, %c0_i32_0 : i32, i32
  }
  func.func @transform_13(%arg0: i32) -> (i32, i32) {
    %c0_i32 = arith.constant 0 : i32
    %c0_i32_0 = arith.constant 0 : i32
    %c0_i32_1 = arith.constant 0 : i32
    return %c0_i32, %c0_i32_0 : i32, i32
  }
  func.func @transform_14(%arg0: i32) -> (i32, i32) {
    %c0_i32 = arith.constant 0 : i32
    %c0_i32_0 = arith.constant 0 : i32
    %c0_i32_1 = arith.constant 0 : i32
    return %c0_i32, %c0_i32_0 : i32, i32
  }
  func.func @transform_15(%arg0: i32) -> (i32, i32) {
    %c0_i32 = arith.constant 0 : i32
    %c0_i32_0 = arith.constant 0 : i32
    %c0_i32_1 = arith.constant 0 : i32
    return %c0_i32, %c0_i32_0 : i32, i32
  }
  func.func @transform_16(%arg0: i32) -> (i32, i32) {
    %c0_i32 = arith.constant 0 : i32
    %c0_i32_0 = arith.constant 0 : i32
    %c0_i32_1 = arith.constant 0 : i32
    return %c0_i32, %c0_i32_0 : i32, i32
  }
  func.func @transform_17(%arg0: i32) -> (i32, i32) {
    %c0_i32 = arith.constant 0 : i32
    %c0_i32_0 = arith.constant 0 : i32
    %c0_i32_1 = arith.constant 0 : i32
    return %c0_i32, %c0_i32_0 : i32, i32
  }
  func.func @transform_18(%arg0: i32) -> (i32, i32) {
    %c0_i32 = arith.constant 0 : i32
    %c0_i32_0 = arith.constant 0 : i32
    return %arg0, %c0_i32 : i32, i32
  }
}

</mosaic_0001>

<llo_original>
// kernel: tcnse_forward.1
$region0: #{tcnse_forward.1}
  #allocation0 [shape = 'u32[]', space=smem, size = 0x4, offset = 0x4, fixed_abs, tag = 'smem constant byte address 0x4 - core index']
  #allocation1 [shape = 'u32[144,128]{1,0:T(1,128)}', space=vmem, size = 0x12000, scoped, tag = 'internal scratch']
  #allocation2 [shape = 'f32[1,1]{1,0:T(1,128)S(1)}', space=vmem, size = 0x200, scoped, tag = 'scoped memory for tcnse_forward.1']
  %s0 = inlined_call_operand.vmem [shape: f32[2,16,1], index: 0, kind: input, shape index: {}]
  %s1 = inlined_call_operand.vmem [shape: f32[3,1,128], index: 1, kind: input, shape index: {}]
  %s2 = inlined_call_operand.vmem [shape: f32[3,1,128], index: 2, kind: input, shape index: {}]
  %s3 = inlined_call_operand.vmem [shape: bf16[2,128,128], index: 3, kind: input, shape index: {}]
  %s4 = inlined_call_operand.vmem [shape: bf16[2,128,64], index: 4, kind: input, shape index: {}]
  %s5 = inlined_call_operand.vmem [shape: bf16[2,64,64], index: 5, kind: input, shape index: {}]
  %s6 = inlined_call_operand.vmem [shape: bf16[128,64], index: 6, kind: input, shape index: {}]
  %s7 = inlined_call_operand.vmem [shape: f32[3,1,64], index: 7, kind: input, shape index: {}]
  %s8 = inlined_call_operand.vmem [shape: bf16[2,64,32], index: 8, kind: input, shape index: {}]
  %s9 = inlined_call_operand.vmem [shape: bf16[2,32,32], index: 9, kind: input, shape index: {}]
  %s10 = inlined_call_operand.vmem [shape: bf16[64,32], index: 10, kind: input, shape index: {}]
  %s11 = inlined_call_operand.vmem [shape: f32[3,1,32], index: 11, kind: input, shape index: {}]
  %s12 = inlined_call_operand.vmem [shape: f32[32,2], index: 12, kind: input, shape index: {}]
  %s13 = inlined_call_operand.vmem [shape: f32[2,32], index: 13, kind: input, shape index: {}]
  %s14 = inlined_call_operand.vmem [shape: f32[32,32], index: 14, kind: input, shape index: {}]
  %s15 = inlined_call_operand.vmem [shape: f32[1,32], index: 15, kind: input, shape index: {}]
  %s16 = inlined_call_operand.vmem [shape: f32[32,1], index: 16, kind: input, shape index: {}]
  %s17 = inlined_call_operand.<no memory space> [shape: f32[1,1], index: 17, kind: input, shape index: {}]
  %s18 = inlined_call_operand.vmem [shape: f32[2,1], index: 18, kind: output, shape index: {}]
  %s19 = sld [smem:[#allocation0]]
  $region82: #{tcnse_forward.1} parent=0
    _
  %s21 = ssub.s32 1, %s19
  %s22 = scalar_select 0, %s21, %s19
  %v23 = vstv %s17
  %24 = vst [vmem:[#allocation2] sm:$0x1] %v23
  // Predicated region
  $region2: #{tcnse_forward.1} parent=0 // pred_check
    _
  $region3: #{tcnse_forward.1} parent=0 // pred_check_branch
    %26 = sbr.rel (0) target = $region5
  $region4: #{tcnse_forward.1} parent=0 // pred_region
    _
  $region5: #{tcnse_forward.1} parent=0 // pred_fallthru
    _
  // Predicated region
  $region6: #{tcnse_forward.1} parent=0 // pred_check
    _
  $region7: #{tcnse_forward.1} parent=0 // pred_check_branch
    %28 = sbr.rel (0) target = $region9
  $region8: #{tcnse_forward.1} parent=0 // pred_region
    _
  $region9: #{tcnse_forward.1} parent=0 // pred_fallthru
    _
  // Predicated region
  $region10: #{tcnse_forward.1} parent=0 // pred_check
    _
  $region11: #{tcnse_forward.1} parent=0 // pred_check_branch
    %30 = sbr.rel (0) target = $region13
  $region12: #{tcnse_forward.1} parent=0 // pred_region
    _
  $region13: #{tcnse_forward.1} parent=0 // pred_fallthru
    _
  // Predicated region
  $region14: #{tcnse_forward.1} parent=0 // pred_check
    _
  $region15: #{tcnse_forward.1} parent=0 // pred_check_branch
    %32 = sbr.rel (0) target = $region17
  $region16: #{tcnse_forward.1} parent=0 // pred_region
    _
  $region17: #{tcnse_forward.1} parent=0 // pred_fallthru
    _
  // Predicated region
  $region18: #{tcnse_forward.1} parent=0 // pred_check
    _
  $region19: #{tcnse_forward.1} parent=0 // pred_check_branch
    %34 = sbr.rel (0) target = $region21
  $region20: #{tcnse_forward.1} parent=0 // pred_region
    _
  $region21: #{tcnse_forward.1} parent=0 // pred_fallthru
    _
  // Predicated region
  $region22: #{tcnse_forward.1} parent=0 // pred_check
    _
  $region23: #{tcnse_forward.1} parent=0 // pred_check_branch
    %36 = sbr.rel (0) target = $region25
  $region24: #{tcnse_forward.1} parent=0 // pred_region
    _
  $region25: #{tcnse_forward.1} parent=0 // pred_fallthru
    _
  // Predicated region
  $region26: #{tcnse_forward.1} parent=0 // pred_check
    _
  $region27: #{tcnse_forward.1} parent=0 // pred_check_branch
    %38 = sbr.rel (0) target = $region29
  $region28: #{tcnse_forward.1} parent=0 // pred_region
    _
  $region29: #{tcnse_forward.1} parent=0 // pred_fallthru
    _
  // Predicated region
  $region30: #{tcnse_forward.1} parent=0 // pred_check
    _
  $region31: #{tcnse_forward.1} parent=0 // pred_check_branch
    %40 = sbr.rel (0) target = $region33
  $region32: #{tcnse_forward.1} parent=0 // pred_region
    _
  $region33: #{tcnse_forward.1} parent=0 // pred_fallthru
    _
  // Predicated region
  $region34: #{tcnse_forward.1} parent=0 // pred_check
    _
  $region35: #{tcnse_forward.1} parent=0 // pred_check_branch
    %42 = sbr.rel (0) target = $region37
  $region36: #{tcnse_forward.1} parent=0 // pred_region
    _
  $region37: #{tcnse_forward.1} parent=0 // pred_fallthru
    _
  // Predicated region
  $region38: #{tcnse_forward.1} parent=0 // pred_check
    _
  $region39: #{tcnse_forward.1} parent=0 // pred_check_branch
    %44 = sbr.rel (0) target = $region41
  $region40: #{tcnse_forward.1} parent=0 // pred_region
    _
  $region41: #{tcnse_forward.1} parent=0 // pred_fallthru
    _
  // Predicated region
  $region42: #{tcnse_forward.1} parent=0 // pred_check
    _
  $region43: #{tcnse_forward.1} parent=0 // pred_check_branch
    %46 = sbr.rel (0) target = $region45
  $region44: #{tcnse_forward.1} parent=0 // pred_region
    _
  $region45: #{tcnse_forward.1} parent=0 // pred_fallthru
    _
  // Predicated region
  $region46: #{tcnse_forward.1} parent=0 // pred_check
    _
  $region47: #{tcnse_forward.1} parent=0 // pred_check_branch
    %48 = sbr.rel (0) target = $region49
  $region48: #{tcnse_forward.1} parent=0 // pred_region
    _
  $region49: #{tcnse_forward.1} parent=0 // pred_fallthru
    _
  // Predicated region
  $region50: #{tcnse_forward.1} parent=0 // pred_check
    _
  $region51: #{tcnse_forward.1} parent=0 // pred_check_branch
    %50 = sbr.rel (0) target = $region53
  $region52: #{tcnse_forward.1} parent=0 // pred_region
    _
  $region53: #{tcnse_forward.1} parent=0 // pred_fallthru
    _
  // Predicated region
  $region54: #{tcnse_forward.1} parent=0 // pred_check
    _
  $region55: #{tcnse_forward.1} parent=0 // pred_check_branch
    %52 = sbr.rel (0) target = $region57
  $region56: #{tcnse_forward.1} parent=0 // pred_region
    _
  $region57: #{tcnse_forward.1} parent=0 // pred_fallthru
    _
  // Predicated region
  $region58: #{tcnse_forward.1} parent=0 // pred_check
    _
  $region59: #{tcnse_forward.1} parent=0 // pred_check_branch
    %54 = sbr.rel (0) target = $region61
  $region60: #{tcnse_forward.1} parent=0 // pred_region
    _
  $region61: #{tcnse_forward.1} parent=0 // pred_fallthru
    _
  // Predicated region
  $region62: #{tcnse_forward.1} parent=0 // pred_check
    _
  $region63: #{tcnse_forward.1} parent=0 // pred_check_branch
    %56 = sbr.rel (0) target = $region65
  $region64: #{tcnse_forward.1} parent=0 // pred_region
    _
  $region65: #{tcnse_forward.1} parent=0 // pred_fallthru
    _
  // Predicated region
  $region66: #{tcnse_forward.1} parent=0 // pred_check
    _
  $region67: #{tcnse_forward.1} parent=0 // pred_check_branch
    %58 = sbr.rel (0) target = $region69
  $region68: #{tcnse_forward.1} parent=0 // pred_region
    _
  $region69: #{tcnse_forward.1} parent=0 // pred_fallthru
    _
  // Predicated region
  $region70: #{tcnse_forward.1} parent=0 // pred_check
    _
  $region71: #{tcnse_forward.1} parent=0 // pred_check_branch
    %60 = sbr.rel (0) target = $region73
  $region72: #{tcnse_forward.1} parent=0 // pred_region
    _
  $region73: #{tcnse_forward.1} parent=0 // pred_fallthru
    _
  %v62 = vld [vmem:[%s0] sm:$0xff]
  %v63 = vld [vmem:[%s0 + $0x8] sm:$0xff]
  %v64 = vld [vmem:[%s0 + $0x10] sm:$0xff]
  %v65 = vld [vmem:[%s0 + $0x18] sm:$0xff]
  %v66 = vlaneseq
  %v67 = vshrl.u32 %v66, 7
  %v68 = vadd.s32 %v67, 8
  %vm69 = vcmp.ge.s32.totalorder %v67, 1
  %vm70 = vcmp.ge.s32.totalorder %v68, 1
  %vm71 = vcmp.ge.s32.totalorder %v67, 2
  %vm72 = vcmp.ge.s32.totalorder %v68, 2
  %vm73 = vcmp.ge.s32.totalorder %v67, 4
  %vm74 = vcmp.ge.s32.totalorder %v68, 4
  %76 = vset.pattern.permute.xlu0 0
  %77 = vperm.xlu0 %76, %v62
  %v78 = vpop.permute.xlu0 %77
  %81 = vset.pattern.permute.xlu0 0
  %82 = vperm.xlu0 %81, %v63
  %v83 = vpop.permute.xlu0 %82
  %86 = vset.pattern.permute.xlu0 0
  %87 = vperm.xlu0 %86, %v64
  %v88 = vpop.permute.xlu0 %87
  %91 = vset.pattern.permute.xlu0 0
  %92 = vperm.xlu0 %91, %v65
  %v93 = vpop.permute.xlu0 %92
  %v95 = vld [vmem:[%s1] sm:$0x1]
  %v97 = vlaneseq
  %v98 = vshrl.u32 %v97, 7
  %v99 = vsub.s32 0, %v98
  %v100 = vrot.slane %v95, %v99
  %v102 = vmul.f32 %v78, %v100
  %v103 = vmul.f32 %v83, %v100
  %v104 = vmul.f32 %v88, %v100
  %v105 = vmul.f32 %v93, %v100
  %v106 = vrot.slane %v102, 7
  %v107 = vrot.slane %v103, 7
  %v108 = vrot.slane %v104, 7
  %v109 = vrot.slane %v105, 7
  %vm110 = vcmp.lt.s32.totalorder %v67, 1
  %v111 = vsel %vm110, %v108, %v109
  %v112 = vsel %vm110, %v107, %v108
  %v113 = vsel %vm110, %v106, %v107
  %v114 = vsel %vm110, %v109, %v106
  %v115 = vsel %vm69, %v114, 0.0
  %v116 = vsel %vm70, %v113, 0.0
  %v117 = vsel %vm69, %v112, 0.0
  %v118 = vsel %vm70, %v111, 0.0
  %s119 = scalar_lea.vmem %s1, 1
  %v120 = vld [vmem:[%s119] sm:$0x1]
  %v122 = vlaneseq
  %v123 = vshrl.u32 %v122, 7
  %v124 = vsub.s32 0, %v123
  %v125 = vrot.slane %v120, %v124
  %v127 = vmul.f32 %v78, %v125
  %v128 = vmul.f32 %v83, %v125
  %v129 = vmul.f32 %v88, %v125
  %v130 = vmul.f32 %v93, %v125
  %v131 = vadd.f32 %v115, %v127
  %v132 = vadd.f32 %v116, %v128
  %v133 = vadd.f32 %v117, %v129
  %v134 = vadd.f32 %v118, %v130
  %v135 = vld [vmem:[%s2] sm:$0x1]
  %v137 = vlaneseq
  %v138 = vshrl.u32 %v137, 7
  %v139 = vsub.s32 0, %v138
  %v140 = vrot.slane %v135, %v139
  %v142 = vadd.f32 %v131, %v140
  %v143 = vadd.f32 %v132, %v140
  %v144 = vadd.f32 %v133, %v140
  %v145 = vadd.f32 %v134, %v140
  %v146 = vmax.f32 %v142, 0.0
  %v147 = vmax.f32 %v143, 0.0
  %v148 = vmax.f32 %v144, 0.0
  %v149 = vmax.f32 %v145, 0.0
  %s150 = scalar_lea.vmem %s1, 2
  %v151 = vld [vmem:[%s150] sm:$0x1]
  %v153 = vlaneseq
  %v154 = vshrl.u32 %v153, 7
  %v155 = vsub.s32 0, %v154
  %v156 = vrot.slane %v151, %v155
  %v158 = vmul.f32 %v78, %v156
  %v159 = vmul.f32 %v83, %v156
  %v160 = vmul.f32 %v88, %v156
  %v161 = vmul.f32 %v93, %v156
  %s162 = scalar_lea.vmem %s2, 2
  %v163 = vld [vmem:[%s162] sm:$0x1]
  %v165 = vlaneseq
  %v166 = vshrl.u32 %v165, 7
  %v167 = vsub.s32 0, %v166
  %v168 = vrot.slane %v163, %v167
  %v170 = vadd.f32 %v158, %v168
  %v171 = vadd.f32 %v159, %v168
  %v172 = vadd.f32 %v160, %v168
  %v173 = vadd.f32 %v161, %v168
  %v174 = vld [vmem:[%s3] sm:$0xf]
  %v175 = vld [vmem:[%s3 + $0x4] sm:$0xf]
  %v176 = vld [vmem:[%s3 + $0x8] sm:$0xf]
  %v177 = vld [vmem:[%s3 + $0xc] sm:$0xf]
  %v178 = vld [vmem:[%s3 + $0x10] sm:$0xf]
  %v179 = vld [vmem:[%s3 + $0x14] sm:$0xf]
  %v180 = vld [vmem:[%s3 + $0x18] sm:$0xf]
  %v181 = vld [vmem:[%s3 + $0x1c] sm:$0xf]
  %v182 = vld [vmem:[%s3 + $0x20] sm:$0xf]
  %v183 = vld [vmem:[%s3 + $0x24] sm:$0xf]
  %v184 = vld [vmem:[%s3 + $0x28] sm:$0xf]
  %v185 = vld [vmem:[%s3 + $0x2c] sm:$0xf]
  %v186 = vld [vmem:[%s3 + $0x30] sm:$0xf]
  %v187 = vld [vmem:[%s3 + $0x34] sm:$0xf]
  %v188 = vld [vmem:[%s3 + $0x38] sm:$0xf]
  %v189 = vld [vmem:[%s3 + $0x3c] sm:$0xf]
  %v190 = vpack.c.bf16 %v147, %v146
  %v191 = vpack.c.bf16 %v149, %v148
  %v208 = vunpack.c.l.b16 %v174
  %v209 = vunpack.c.l.b16 %v175
  %v210 = vunpack.c.l.b16 %v176
  %v211 = vunpack.c.l.b16 %v177
  %v212 = vunpack.c.l.b16 %v178
  %v213 = vunpack.c.l.b16 %v179
  %v214 = vunpack.c.l.b16 %v180
  %v215 = vunpack.c.l.b16 %v181
  %v216 = vunpack.c.l.b16 %v182
  %v217 = vunpack.c.l.b16 %v183
  %v218 = vunpack.c.l.b16 %v184
  %v219 = vunpack.c.l.b16 %v185
  %v220 = vunpack.c.l.b16 %v186
  %v221 = vunpack.c.l.b16 %v187
  %v222 = vunpack.c.l.b16 %v188
  %v223 = vunpack.c.l.b16 %v189
  %v224 = vpack.c.b16 %v209, %v208
  %v225 = vpack.c.b16 %v211, %v210
  %v226 = vpack.c.b16 %v213, %v212
  %v227 = vpack.c.b16 %v215, %v214
  %v228 = vpack.c.b16 %v217, %v216
  %v229 = vpack.c.b16 %v219, %v218
  %v230 = vpack.c.b16 %v221, %v220
  %v231 = vpack.c.b16 %v223, %v222
  %240 = vmatprep.subr.bf16.mxu0 0
  %241 = vmatpush1.bf16.msra.mxu0 %v224
  %242 = vmatprep.subr.bf16.mxu0 0
  %243 = vmatpush1.bf16.msra.mxu0 %v225
  %244 = vmatprep.subr.bf16.mxu0 0
  %245 = vmatpush1.bf16.msra.mxu0 %v226
  %246 = vmatprep.subr.bf16.mxu0 0
  %247 = vmatpush1.bf16.msra.mxu0 %v227
  %248 = vmatprep.subr.bf16.mxu0 0
  %249 = vmatpush1.bf16.msra.mxu0 %v228
  %250 = vmatprep.subr.bf16.mxu0 0
  %251 = vmatpush1.bf16.msra.mxu0 %v229
  %252 = vmatprep.subr.bf16.mxu0 0
  %253 = vmatpush1.bf16.msra.mxu0 %v230
  %254 = vmatprep.subr.bf16.mxu0 0
  %255 = vmatpush1.bf16.msra.mxu0 %v231
  %256 = vmatprep.subr.bf16.mxu0 0
  %257 = vmatpush1.bf16.msra.mxu0 0
  %258 = vmatprep.subr.bf16.mxu0 0
  %259 = vmatpush1.bf16.msra.mxu0 0
  %260 = vmatprep.subr.bf16.mxu0 0
  %261 = vmatpush1.bf16.msra.mxu0 0
  %262 = vmatprep.subr.bf16.mxu0 0
  %263 = vmatpush1.bf16.msra.mxu0 0
  %264 = vmatprep.subr.bf16.mxu0 0
  %265 = vmatpush1.bf16.msra.mxu0 0
  %266 = vmatprep.subr.bf16.mxu0 0
  %267 = vmatpush1.bf16.msra.mxu0 0
  %268 = vmatprep.subr.bf16.mxu0 0
  %269 = vmatpush1.bf16.msra.mxu0 0
  %270 = vmatprep.subr.bf16.mxu0 0
  %271 = vmatpush1.bf16.msra.mxu0 0
  %272 = vmatprep.mubr.bf16.mxu0 0
  %273 = vmatmul.mubr.bf16.gmra.mrb[0].mxu0 %v190
  %v274 = vpop.f32.mrb[0].mxu0
  %v275 = vadd.f32 0.0, %v274
  %v276 = vpop.f32.mrb[0].mxu0
  %v277 = vpop.f32.mrb[0].mxu0
  %v278 = vadd.f32 0.0, %v277
  %v279 = vpop.f32.mrb[0].mxu0
  %280 = vmatprep.mubr.bf16.mxu0 0
  %281 = vmatmul.mubr.bf16.gmra.mrb[0].mxu0 %v191
  %v282 = vpop.f32.mrb[0].mxu0
  %v283 = vadd.f32 0.0, %v282
  %v284 = vpop.f32.mrb[0].mxu0
  %v285 = vpop.f32.mrb[0].mxu0
  %v286 = vadd.f32 0.0, %v285
  %v287 = vpop.f32.mrb[0].mxu0
  %288 = vdwg.mxu0
  %v289 = vrot.slane %v275, 7
  %v290 = vrot.slane %v278, 7
  %v291 = vrot.slane %v283, 7
  %v292 = vrot.slane %v286, 7
  %v293 = vsel %vm110, %v291, %v292
  %v294 = vsel %vm110, %v290, %v291
  %v295 = vsel %vm110, %v289, %v290
  %v296 = vsel %vm110, %v292, %v289
  %v297 = vsel %vm69, %v296, 0.0
  %v298 = vsel %vm70, %v295, 0.0
  %v299 = vsel %vm69, %v294, 0.0
  %v300 = vsel %vm70, %v293, 0.0
  %s301 = scalar_lea.vmem %s3, 64
  %v302 = vld [vmem:[%s301] sm:$0xf]
  %v303 = vld [vmem:[%s301 + $0x4] sm:$0xf]
  %v304 = vld [vmem:[%s301 + $0x8] sm:$0xf]
  %v305 = vld [vmem:[%s301 + $0xc] sm:$0xf]
  %v306 = vld [vmem:[%s301 + $0x10] sm:$0xf]
  %v307 = vld [vmem:[%s301 + $0x14] sm:$0xf]
  %v308 = vld [vmem:[%s301 + $0x18] sm:$0xf]
  %v309 = vld [vmem:[%s301 + $0x1c] sm:$0xf]
  %v310 = vld [vmem:[%s301 + $0x20] sm:$0xf]
  %v311 = vld [vmem:[%s301 + $0x24] sm:$0xf]
  %v312 = vld [vmem:[%s301 + $0x28] sm:$0xf]
  %v313 = vld [vmem:[%s301 + $0x2c] sm:$0xf]
  %v314 = vld [vmem:[%s301 + $0x30] sm:$0xf]
  %v315 = vld [vmem:[%s301 + $0x34] sm:$0xf]
  %v316 = vld [vmem:[%s301 + $0x38] sm:$0xf]
  %v317 = vld [vmem:[%s301 + $0x3c] sm:$0xf]
  %v334 = vunpack.c.l.b16 %v302
  %v335 = vunpack.c.l.b16 %v303
  %v336 = vunpack.c.l.b16 %v304
  %v337 = vunpack.c.l.b16 %v305
  %v338 = vunpack.c.l.b16 %v306
  %v339 = vunpack.c.l.b16 %v307
  %v340 = vunpack.c.l.b16 %v308
  %v341 = vunpack.c.l.b16 %v309
  %v342 = vunpack.c.l.b16 %v310
  %v343 = vunpack.c.l.b16 %v311
  %v344 = vunpack.c.l.b16 %v312
  %v345 = vunpack.c.l.b16 %v313
  %v346 = vunpack.c.l.b16 %v314
  %v347 = vunpack.c.l.b16 %v315
  %v348 = vunpack.c.l.b16 %v316
  %v349 = vunpack.c.l.b16 %v317
  %v350 = vpack.c.b16 %v335, %v334
  %v351 = vpack.c.b16 %v337, %v336
  %v352 = vpack.c.b16 %v339, %v338
  %v353 = vpack.c.b16 %v341, %v340
  %v354 = vpack.c.b16 %v343, %v342
  %v355 = vpack.c.b16 %v345, %v344
  %v356 = vpack.c.b16 %v347, %v346
  %v357 = vpack.c.b16 %v349, %v348
  %366 = vmatprep.subr.bf16.mxu0 0
  %367 = vmatpush1.bf16.msra.mxu0 %v350
  %368 = vmatprep.subr.bf16.mxu0 0
  %369 = vmatpush1.bf16.msra.mxu0 %v351
  %370 = vmatprep.subr.bf16.mxu0 0
  %371 = vmatpush1.bf16.msra.mxu0 %v352
  %372 = vmatprep.subr.bf16.mxu0 0
  %373 = vmatpush1.bf16.msra.mxu0 %v353
  %374 = vmatprep.subr.bf16.mxu0 0
  %375 = vmatpush1.bf16.msra.mxu0 %v354
  %376 = vmatprep.subr.bf16.mxu0 0
  %377 = vmatpush1.bf16.msra.mxu0 %v355
  %378 = vmatprep.subr.bf16.mxu0 0
  %379 = vmatpush1.bf16.msra.mxu0 %v356
  %380 = vmatprep.subr.bf16.mxu0 0
  %381 = vmatpush1.bf16.msra.mxu0 %v357
  %382 = vmatprep.subr.bf16.mxu0 0
  %383 = vmatpush1.bf16.msra.mxu0 0
  %384 = vmatprep.subr.bf16.mxu0 0
  %385 = vmatpush1.bf16.msra.mxu0 0
  %386 = vmatprep.subr.bf16.mxu0 0
  %387 = vmatpush1.bf16.msra.mxu0 0
  %388 = vmatprep.subr.bf16.mxu0 0
  %389 = vmatpush1.bf16.msra.mxu0 0
  %390 = vmatprep.subr.bf16.mxu0 0
  %391 = vmatpush1.bf16.msra.mxu0 0
  %392 = vmatprep.subr.bf16.mxu0 0
  %393 = vmatpush1.bf16.msra.mxu0 0
  %394 = vmatprep.subr.bf16.mxu0 0
  %395 = vmatpush1.bf16.msra.mxu0 0
  %396 = vmatprep.subr.bf16.mxu0 0
  %397 = vmatpush1.bf16.msra.mxu0 0
  %398 = vmatprep.mubr.bf16.mxu0 0
  %399 = vmatmul.mubr.bf16.gmra.mrb[0].mxu0 %v190
  %v400 = vpop.f32.mrb[0].mxu0
  %v401 = vadd.f32 0.0, %v400
  %v402 = vpop.f32.mrb[0].mxu0
  %v403 = vpop.f32.mrb[0].mxu0
  %v404 = vadd.f32 0.0, %v403
  %v405 = vpop.f32.mrb[0].mxu0
  %406 = vmatprep.mubr.bf16.mxu0 0
  %407 = vmatmul.mubr.bf16.gmra.mrb[0].mxu0 %v191
  %v408 = vpop.f32.mrb[0].mxu0
  %v409 = vadd.f32 0.0, %v408
  %v410 = vpop.f32.mrb[0].mxu0
  %v411 = vpop.f32.mrb[0].mxu0
  %v412 = vadd.f32 0.0, %v411
  %v413 = vpop.f32.mrb[0].mxu0
  %414 = vdwg.mxu0
  %v415 = vadd.f32 %v297, %v401
  %v416 = vadd.f32 %v298, %v404
  %v417 = vadd.f32 %v299, %v409
  %v418 = vadd.f32 %v300, %v412
  %s419 = scalar_lea.vmem %s2, 1
  %v420 = vld [vmem:[%s419] sm:$0x1]
  %v422 = vlaneseq
  %v423 = vshrl.u32 %v422, 7
  %v424 = vsub.s32 0, %v423
  %v425 = vrot.slane %v420, %v424
  %v427 = vadd.f32 %v415, %v425
  %v428 = vadd.f32 %v416, %v425
  %v429 = vadd.f32 %v417, %v425
  %v430 = vadd.f32 %v418, %v425
  %v431 = vmax.f32 %v427, 0.0
  %v432 = vmax.f32 %v428, 0.0
  %v433 = vmax.f32 %v429, 0.0
  %v434 = vmax.f32 %v430, 0.0
  %v435 = vadd.f32 %v431, %v170
  %v436 = vadd.f32 %v432, %v171
  %v437 = vadd.f32 %v433, %v172
  %v438 = vadd.f32 %v434, %v173
  %v439 = vmax.f32 %v435, 0.0
  %v440 = vmax.f32 %v436, 0.0
  %v441 = vmax.f32 %v437, 0.0
  %v442 = vmax.f32 %v438, 0.0
  %v443 = vld [vmem:[%s4] sm:$0xf]
  %v444 = vld [vmem:[%s4 + $0x4] sm:$0xf]
  %v445 = vld [vmem:[%s4 + $0x8] sm:$0xf]
  %v446 = vld [vmem:[%s4 + $0xc] sm:$0xf]
  %v447 = vld [vmem:[%s4 + $0x10] sm:$0xf]
  %v448 = vld [vmem:[%s4 + $0x14] sm:$0xf]
  %v449 = vld [vmem:[%s4 + $0x18] sm:$0xf]
  %v450 = vld [vmem:[%s4 + $0x1c] sm:$0xf]
  %v451 = vld [vmem:[%s4 + $0x20] sm:$0xf]
  %v452 = vld [vmem:[%s4 + $0x24] sm:$0xf]
  %v453 = vld [vmem:[%s4 + $0x28] sm:$0xf]
  %v454 = vld [vmem:[%s4 + $0x2c] sm:$0xf]
  %v455 = vld [vmem:[%s4 + $0x30] sm:$0xf]
  %v456 = vld [vmem:[%s4 + $0x34] sm:$0xf]
  %v457 = vld [vmem:[%s4 + $0x38] sm:$0xf]
  %v458 = vld [vmem:[%s4 + $0x3c] sm:$0xf]
  %v459 = vpack.c.bf16 %v440, %v439
  %v460 = vpack.c.bf16 %v442, %v441
  %v477 = vunpack.c.l.b16 %v443
  %v478 = vunpack.c.l.b16 %v444
  %v479 = vunpack.c.l.b16 %v445
  %v480 = vunpack.c.l.b16 %v446
  %v481 = vunpack.c.l.b16 %v447
  %v482 = vunpack.c.l.b16 %v448
  %v483 = vunpack.c.l.b16 %v449
  %v484 = vunpack.c.l.b16 %v450
  %v485 = vunpack.c.l.b16 %v451
  %v486 = vunpack.c.l.b16 %v452
  %v487 = vunpack.c.l.b16 %v453
  %v488 = vunpack.c.l.b16 %v454
  %v489 = vunpack.c.l.b16 %v455
  %v490 = vunpack.c.l.b16 %v456
  %v491 = vunpack.c.l.b16 %v457
  %v492 = vunpack.c.l.b16 %v458
  %v493 = vpack.c.b16 %v478, %v477
  %v494 = vpack.c.b16 %v480, %v479
  %v495 = vpack.c.b16 %v482, %v481
  %v496 = vpack.c.b16 %v484, %v483
  %v497 = vpack.c.b16 %v486, %v485
  %v498 = vpack.c.b16 %v488, %v487
  %v499 = vpack.c.b16 %v490, %v489
  %v500 = vpack.c.b16 %v492, %v491
  %509 = vmatprep.subr.bf16.mxu0 0
  %510 = vmatpush1.bf16.msra.mxu0 %v493
  %511 = vmatprep.subr.bf16.mxu0 0
  %512 = vmatpush1.bf16.msra.mxu0 %v494
  %513 = vmatprep.subr.bf16.mxu0 0
  %514 = vmatpush1.bf16.msra.mxu0 %v495
  %515 = vmatprep.subr.bf16.mxu0 0
  %516 = vmatpush1.bf16.msra.mxu0 %v496
  %517 = vmatprep.subr.bf16.mxu0 0
  %518 = vmatpush1.bf16.msra.mxu0 %v497
  %519 = vmatprep.subr.bf16.mxu0 0
  %520 = vmatpush1.bf16.msra.mxu0 %v498
  %521 = vmatprep.subr.bf16.mxu0 0
  %522 = vmatpush1.bf16.msra.mxu0 %v499
  %523 = vmatprep.subr.bf16.mxu0 0
  %524 = vmatpush1.bf16.msra.mxu0 %v500
  %525 = vmatprep.subr.bf16.mxu0 0
  %526 = vmatpush1.bf16.msra.mxu0 0
  %527 = vmatprep.subr.bf16.mxu0 0
  %528 = vmatpush1.bf16.msra.mxu0 0
  %529 = vmatprep.subr.bf16.mxu0 0
  %530 = vmatpush1.bf16.msra.mxu0 0
  %531 = vmatprep.subr.bf16.mxu0 0
  %532 = vmatpush1.bf16.msra.mxu0 0
  %533 = vmatprep.subr.bf16.mxu0 0
  %534 = vmatpush1.bf16.msra.mxu0 0
  %535 = vmatprep.subr.bf16.mxu0 0
  %536 = vmatpush1.bf16.msra.mxu0 0
  %537 = vmatprep.subr.bf16.mxu0 0
  %538 = vmatpush1.bf16.msra.mxu0 0
  %539 = vmatprep.subr.bf16.mxu0 0
  %540 = vmatpush1.bf16.msra.mxu0 0
  %541 = vmatprep.mubr.bf16.mxu0 0
  %542 = vmatmul.mubr.bf16.gmra.mrb[0].mxu0 %v459
  %v543 = vpop.f32.mrb[0].mxu0
  %v544 = vadd.f32 0.0, %v543
  %v545 = vpop.f32.mrb[0].mxu0
  %v546 = vpop.f32.mrb[0].mxu0
  %v547 = vadd.f32 0.0, %v546
  %v548 = vpop.f32.mrb[0].mxu0
  %549 = vmatprep.mubr.bf16.mxu0 0
  %550 = vmatmul.mubr.bf16.gmra.mrb[0].mxu0 %v460
  %v551 = vpop.f32.mrb[0].mxu0
  %v552 = vadd.f32 0.0, %v551
  %v553 = vpop.f32.mrb[0].mxu0
  %v554 = vpop.f32.mrb[0].mxu0
  %v555 = vadd.f32 0.0, %v554
  %v556 = vpop.f32.mrb[0].mxu0
  %557 = vdwg.mxu0
  %v558 = vrot.slane %v544, 6
  %v559 = vrot.slane %v547, 6
  %v560 = vrot.slane %v552, 6
  %v561 = vrot.slane %v555, 6
  %vm562 = vcmp.lt.s32.totalorder %v67, 2
  %v563 = vsel %vm562, %v560, %v561
  %v564 = vsel %vm562, %v559, %v560
  %v565 = vsel %vm562, %v558, %v559
  %v566 = vsel %vm562, %v561, %v558
  %v567 = vsel %vm71, %v566, 0.0
  %v568 = vsel %vm72, %v565, 0.0
  %v569 = vsel %vm71, %v564, 0.0
  %v570 = vsel %vm72, %v563, 0.0
  %s571 = scalar_lea.vmem %s4, 64
  %v572 = vld [vmem:[%s571] sm:$0xf]
  %v573 = vld [vmem:[%s571 + $0x4] sm:$0xf]
  %v574 = vld [vmem:[%s571 + $0x8] sm:$0xf]
  %v575 = vld [vmem:[%s571 + $0xc] sm:$0xf]
  %v576 = vld [vmem:[%s571 + $0x10] sm:$0xf]
  %v577 = vld [vmem:[%s571 + $0x14] sm:$0xf]
  %v578 = vld [vmem:[%s571 + $0x18] sm:$0xf]
  %v579 = vld [vmem:[%s571 + $0x1c] sm:$0xf]
  %v580 = vld [vmem:[%s571 + $0x20] sm:$0xf]
  %v581 = vld [vmem:[%s571 + $0x24] sm:$0xf]
  %v582 = vld [vmem:[%s571 + $0x28] sm:$0xf]
  %v583 = vld [vmem:[%s571 + $0x2c] sm:$0xf]
  %v584 = vld [vmem:[%s571 + $0x30] sm:$0xf]
  %v585 = vld [vmem:[%s571 + $0x34] sm:$0xf]
  %v586 = vld [vmem:[%s571 + $0x38] sm:$0xf]
  %v587 = vld [vmem:[%s571 + $0x3c] sm:$0xf]
  %v604 = vunpack.c.l.b16 %v572
  %v605 = vunpack.c.l.b16 %v573
  %v606 = vunpack.c.l.b16 %v574
  %v607 = vunpack.c.l.b16 %v575
  %v608 = vunpack.c.l.b16 %v576
  %v609 = vunpack.c.l.b16 %v577
  %v610 = vunpack.c.l.b16 %v578
  %v611 = vunpack.c.l.b16 %v579
  %v612 = vunpack.c.l.b16 %v580
  %v613 = vunpack.c.l.b16 %v581
  %v614 = vunpack.c.l.b16 %v582
  %v615 = vunpack.c.l.b16 %v583
  %v616 = vunpack.c.l.b16 %v584
  %v617 = vunpack.c.l.b16 %v585
  %v618 = vunpack.c.l.b16 %v586
  %v619 = vunpack.c.l.b16 %v587
  %v620 = vpack.c.b16 %v605, %v604
  %v621 = vpack.c.b16 %v607, %v606
  %v622 = vpack.c.b16 %v609, %v608
  %v623 = vpack.c.b16 %v611, %v610
  %v624 = vpack.c.b16 %v613, %v612
  %v625 = vpack.c.b16 %v615, %v614
  %v626 = vpack.c.b16 %v617, %v616
  %v627 = vpack.c.b16 %v619, %v618
  %636 = vmatprep.subr.bf16.mxu0 0
  %637 = vmatpush1.bf16.msra.mxu0 %v620
  %638 = vmatprep.subr.bf16.mxu0 0
  %639 = vmatpush1.bf16.msra.mxu0 %v621
  %640 = vmatprep.subr.bf16.mxu0 0
  %641 = vmatpush1.bf16.msra.mxu0 %v622
  %642 = vmatprep.subr.bf16.mxu0 0
  %643 = vmatpush1.bf16.msra.mxu0 %v623
  %644 = vmatprep.subr.bf16.mxu0 0
  %645 = vmatpush1.bf16.msra.mxu0 %v624
  %646 = vmatprep.subr.bf16.mxu0 0
  %647 = vmatpush1.bf16.msra.mxu0 %v625
  %648 = vmatprep.subr.bf16.mxu0 0
  %649 = vmatpush1.bf16.msra.mxu0 %v626
  %650 = vmatprep.subr.bf16.mxu0 0
  %651 = vmatpush1.bf16.msra.mxu0 %v627
  %652 = vmatprep.subr.bf16.mxu0 0
  %653 = vmatpush1.bf16.msra.mxu0 0
  %654 = vmatprep.subr.bf16.mxu0 0
  %655 = vmatpush1.bf16.msra.mxu0 0
  %656 = vmatprep.subr.bf16.mxu0 0
  %657 = vmatpush1.bf16.msra.mxu0 0
  %658 = vmatprep.subr.bf16.mxu0 0
  %659 = vmatpush1.bf16.msra.mxu0 0
  %660 = vmatprep.subr.bf16.mxu0 0
  %661 = vmatpush1.bf16.msra.mxu0 0
  %662 = vmatprep.subr.bf16.mxu0 0
  %663 = vmatpush1.bf16.msra.mxu0 0
  %664 = vmatprep.subr.bf16.mxu0 0
  %665 = vmatpush1.bf16.msra.mxu0 0
  %666 = vmatprep.subr.bf16.mxu0 0
  %667 = vmatpush1.bf16.msra.mxu0 0
  %668 = vmatprep.mubr.bf16.mxu0 0
  %669 = vmatmul.mubr.bf16.gmra.mrb[0].mxu0 %v459
  %v670 = vpop.f32.mrb[0].mxu0
  %v671 = vadd.f32 0.0, %v670
  %v672 = vpop.f32.mrb[0].mxu0
  %v673 = vpop.f32.mrb[0].mxu0
  %v674 = vadd.f32 0.0, %v673
  %v675 = vpop.f32.mrb[0].mxu0
  %676 = vmatprep.mubr.bf16.mxu0 0
  %677 = vmatmul.mubr.bf16.gmra.mrb[0].mxu0 %v460
  %v678 = vpop.f32.mrb[0].mxu0
  %v679 = vadd.f32 0.0, %v678
  %v680 = vpop.f32.mrb[0].mxu0
  %v681 = vpop.f32.mrb[0].mxu0
  %v682 = vadd.f32 0.0, %v681
  %v683 = vpop.f32.mrb[0].mxu0
  %684 = vdwg.mxu0
  %v685 = vadd.f32 %v567, %v671
  %v686 = vadd.f32 %v568, %v674
  %v687 = vadd.f32 %v569, %v679
  %v688 = vadd.f32 %v570, %v682
  %v689 = vld [vmem:[%s7] sm:$0x1]
  %v691 = vlaneseq
  %v692 = vshrl.u32 %v691, 7
  %v693 = vsub.s32 0, %v692
  %v694 = vrot.slane %v689, %v693
  %v696 = vadd.f32 %v685, %v694
  %v697 = vadd.f32 %v686, %v694
  %v698 = vadd.f32 %v687, %v694
  %v699 = vadd.f32 %v688, %v694
  %v700 = vmax.f32 %v696, 0.0
  %v701 = vmax.f32 %v697, 0.0
  %v702 = vmax.f32 %v698, 0.0
  %v703 = vmax.f32 %v699, 0.0
  %v704 = vld [vmem:[%s5] sm:$0xf]
  %v705 = vld [vmem:[%s5 + $0x4] sm:$0xf]
  %v706 = vld [vmem:[%s5 + $0x8] sm:$0xf]
  %v707 = vld [vmem:[%s5 + $0xc] sm:$0xf]
  %v708 = vld [vmem:[%s5 + $0x10] sm:$0xf]
  %v709 = vld [vmem:[%s5 + $0x14] sm:$0xf]
  %v710 = vld [vmem:[%s5 + $0x18] sm:$0xf]
  %v711 = vld [vmem:[%s5 + $0x1c] sm:$0xf]
  %v712 = vpack.c.bf16 %v701, %v700
  %v713 = vpack.c.bf16 %v703, %v702
  %v722 = vunpack.c.l.b16 %v704
  %v723 = vunpack.c.l.b16 %v705
  %v724 = vunpack.c.l.b16 %v706
  %v725 = vunpack.c.l.b16 %v707
  %v726 = vunpack.c.l.b16 %v708
  %v727 = vunpack.c.l.b16 %v709
  %v728 = vunpack.c.l.b16 %v710
  %v729 = vunpack.c.l.b16 %v711
  %v730 = vpack.c.b16 %v723, %v722
  %v731 = vpack.c.b16 %v725, %v724
  %v732 = vpack.c.b16 %v727, %v726
  %v733 = vpack.c.b16 %v729, %v728
  %vm738 = vcmask 523264
  %v740 = vsel %vm738, %v712, 0
  %v743 = vsel %vm738, %v713, 0
  %745 = vmatprep.subr.bf16.mxu0 0
  %746 = vmatpush1.bf16.msra.mxu0 %v730
  %747 = vmatprep.subr.bf16.mxu0 0
  %748 = vmatpush1.bf16.msra.mxu0 %v731
  %749 = vmatprep.subr.bf16.mxu0 0
  %750 = vmatpush1.bf16.msra.mxu0 %v732
  %751 = vmatprep.subr.bf16.mxu0 0
  %752 = vmatpush1.bf16.msra.mxu0 %v733
  %753 = vmatprep.subr.bf16.mxu0 0
  %754 = vmatpush1.bf16.msra.mxu0 0
  %755 = vmatprep.subr.bf16.mxu0 0
  %756 = vmatpush1.bf16.msra.mxu0 0
  %757 = vmatprep.subr.bf16.mxu0 0
  %758 = vmatpush1.bf16.msra.mxu0 0
  %759 = vmatprep.subr.bf16.mxu0 0
  %760 = vmatpush1.bf16.msra.mxu0 0
  %761 = vmatprep.subr.bf16.mxu0 0
  %762 = vmatpush1.bf16.msra.mxu0 0
  %763 = vmatprep.subr.bf16.mxu0 0
  %764 = vmatpush1.bf16.msra.mxu0 0
  %765 = vmatprep.subr.bf16.mxu0 0
  %766 = vmatpush1.bf16.msra.mxu0 0
  %767 = vmatprep.subr.bf16.mxu0 0
  %768 = vmatpush1.bf16.msra.mxu0 0
  %769 = vmatprep.subr.bf16.mxu0 0
  %770 = vmatpush1.bf16.msra.mxu0 0
  %771 = vmatprep.subr.bf16.mxu0 0
  %772 = vmatpush1.bf16.msra.mxu0 0
  %773 = vmatprep.subr.bf16.mxu0 0
  %774 = vmatpush1.bf16.msra.mxu0 0
  %775 = vmatprep.subr.bf16.mxu0 0
  %776 = vmatpush1.bf16.msra.mxu0 0
  %777 = vmatprep.mubr.bf16.mxu0 0
  %778 = vmatmul.mubr.bf16.gmra.mrb[0].mxu0 %v740
  %v779 = vpop.f32.mrb[0].mxu0
  %v780 = vadd.f32 0.0, %v779
  %v781 = vpop.f32.mrb[0].mxu0
  %v782 = vpop.f32.mrb[0].mxu0
  %v783 = vadd.f32 0.0, %v782
  %v784 = vpop.f32.mrb[0].mxu0
  %785 = vmatprep.mubr.bf16.mxu0 0
  %786 = vmatmul.mubr.bf16.gmra.mrb[0].mxu0 %v743
  %v787 = vpop.f32.mrb[0].mxu0
  %v788 = vadd.f32 0.0, %v787
  %v789 = vpop.f32.mrb[0].mxu0
  %v790 = vpop.f32.mrb[0].mxu0
  %v791 = vadd.f32 0.0, %v790
  %v792 = vpop.f32.mrb[0].mxu0
  %793 = vdwg.mxu0
  %v794 = vrot.slane %v780, 6
  %v795 = vrot.slane %v783, 6
  %v796 = vrot.slane %v788, 6
  %v797 = vrot.slane %v791, 6
  %v798 = vsel %vm562, %v796, %v797
  %v799 = vsel %vm562, %v795, %v796
  %v800 = vsel %vm562, %v794, %v795
  %v801 = vsel %vm562, %v797, %v794
  %v802 = vsel %vm71, %v801, 0.0
  %v803 = vsel %vm72, %v800, 0.0
  %v804 = vsel %vm71, %v799, 0.0
  %v805 = vsel %vm72, %v798, 0.0
  %s806 = scalar_lea.vmem %s5, 32
  %v807 = vld [vmem:[%s806] sm:$0xf]
  %v808 = vld [vmem:[%s806 + $0x4] sm:$0xf]
  %v809 = vld [vmem:[%s806 + $0x8] sm:$0xf]
  %v810 = vld [vmem:[%s806 + $0xc] sm:$0xf]
  %v811 = vld [vmem:[%s806 + $0x10] sm:$0xf]
  %v812 = vld [vmem:[%s806 + $0x14] sm:$0xf]
  %v813 = vld [vmem:[%s806 + $0x18] sm:$0xf]
  %v814 = vld [vmem:[%s806 + $0x1c] sm:$0xf]
  %v823 = vunpack.c.l.b16 %v807
  %v824 = vunpack.c.l.b16 %v808
  %v825 = vunpack.c.l.b16 %v809
  %v826 = vunpack.c.l.b16 %v810
  %v827 = vunpack.c.l.b16 %v811
  %v828 = vunpack.c.l.b16 %v812
  %v829 = vunpack.c.l.b16 %v813
  %v830 = vunpack.c.l.b16 %v814
  %v831 = vpack.c.b16 %v824, %v823
  %v832 = vpack.c.b16 %v826, %v825
  %v833 = vpack.c.b16 %v828, %v827
  %v834 = vpack.c.b16 %v830, %v829
  %839 = vmatprep.subr.bf16.mxu0 0
  %840 = vmatpush1.bf16.msra.mxu0 %v831
  %841 = vmatprep.subr.bf16.mxu0 0
  %842 = vmatpush1.bf16.msra.mxu0 %v832
  %843 = vmatprep.subr.bf16.mxu0 0
  %844 = vmatpush1.bf16.msra.mxu0 %v833
  %845 = vmatprep.subr.bf16.mxu0 0
  %846 = vmatpush1.bf16.msra.mxu0 %v834
  %847 = vmatprep.subr.bf16.mxu0 0
  %848 = vmatpush1.bf16.msra.mxu0 0
  %849 = vmatprep.subr.bf16.mxu0 0
  %850 = vmatpush1.bf16.msra.mxu0 0
  %851 = vmatprep.subr.bf16.mxu0 0
  %852 = vmatpush1.bf16.msra.mxu0 0
  %853 = vmatprep.subr.bf16.mxu0 0
  %854 = vmatpush1.bf16.msra.mxu0 0
  %855 = vmatprep.subr.bf16.mxu0 0
  %856 = vmatpush1.bf16.msra.mxu0 0
  %857 = vmatprep.subr.bf16.mxu0 0
  %858 = vmatpush1.bf16.msra.mxu0 0
  %859 = vmatprep.subr.bf16.mxu0 0
  %860 = vmatpush1.bf16.msra.mxu0 0
  %861 = vmatprep.subr.bf16.mxu0 0
  %862 = vmatpush1.bf16.msra.mxu0 0
  %863 = vmatprep.subr.bf16.mxu0 0
  %864 = vmatpush1.bf16.msra.mxu0 0
  %865 = vmatprep.subr.bf16.mxu0 0
  %866 = vmatpush1.bf16.msra.mxu0 0
  %867 = vmatprep.subr.bf16.mxu0 0
  %868 = vmatpush1.bf16.msra.mxu0 0
  %869 = vmatprep.subr.bf16.mxu0 0
  %870 = vmatpush1.bf16.msra.mxu0 0
  %871 = vmatprep.mubr.bf16.mxu0 0
  %872 = vmatmul.mubr.bf16.gmra.mrb[0].mxu0 %v740
  %v873 = vpop.f32.mrb[0].mxu0
  %v874 = vadd.f32 0.0, %v873
  %v875 = vpop.f32.mrb[0].mxu0
  %v876 = vpop.f32.mrb[0].mxu0
  %v877 = vadd.f32 0.0, %v876
  %v878 = vpop.f32.mrb[0].mxu0
  %879 = vmatprep.mubr.bf16.mxu0 0
  %880 = vmatmul.mubr.bf16.gmra.mrb[0].mxu0 %v743
  %v881 = vpop.f32.mrb[0].mxu0
  %v882 = vadd.f32 0.0, %v881
  %v883 = vpop.f32.mrb[0].mxu0
  %v884 = vpop.f32.mrb[0].mxu0
  %v885 = vadd.f32 0.0, %v884
  %v886 = vpop.f32.mrb[0].mxu0
  %887 = vdwg.mxu0
  %v888 = vadd.f32 %v802, %v874
  %v889 = vadd.f32 %v803, %v877
  %v890 = vadd.f32 %v804, %v882
  %v891 = vadd.f32 %v805, %v885
  %s892 = scalar_lea.vmem %s7, 1
  %v893 = vld [vmem:[%s892] sm:$0x1]
  %v895 = vlaneseq
  %v896 = vshrl.u32 %v895, 7
  %v897 = vsub.s32 0, %v896
  %v898 = vrot.slane %v893, %v897
  %v900 = vadd.f32 %v888, %v898
  %v901 = vadd.f32 %v889, %v898
  %v902 = vadd.f32 %v890, %v898
  %v903 = vadd.f32 %v891, %v898
  %v904 = vmax.f32 %v900, 0.0
  %v905 = vmax.f32 %v901, 0.0
  %v906 = vmax.f32 %v902, 0.0
  %v907 = vmax.f32 %v903, 0.0
  %v908 = vld [vmem:[%s6] sm:$0xf]
  %v909 = vld [vmem:[%s6 + $0x4] sm:$0xf]
  %v910 = vld [vmem:[%s6 + $0x8] sm:$0xf]
  %v911 = vld [vmem:[%s6 + $0xc] sm:$0xf]
  %v912 = vld [vmem:[%s6 + $0x10] sm:$0xf]
  %v913 = vld [vmem:[%s6 + $0x14] sm:$0xf]
  %v914 = vld [vmem:[%s6 + $0x18] sm:$0xf]
  %v915 = vld [vmem:[%s6 + $0x1c] sm:$0xf]
  %v916 = vld [vmem:[%s6 + $0x20] sm:$0xf]
  %v917 = vld [vmem:[%s6 + $0x24] sm:$0xf]
  %v918 = vld [vmem:[%s6 + $0x28] sm:$0xf]
  %v919 = vld [vmem:[%s6 + $0x2c] sm:$0xf]
  %v920 = vld [vmem:[%s6 + $0x30] sm:$0xf]
  %v921 = vld [vmem:[%s6 + $0x34] sm:$0xf]
  %v922 = vld [vmem:[%s6 + $0x38] sm:$0xf]
  %v923 = vld [vmem:[%s6 + $0x3c] sm:$0xf]
  %v940 = vunpack.c.l.b16 %v908
  %v941 = vunpack.c.l.b16 %v909
  %v942 = vunpack.c.l.b16 %v910
  %v943 = vunpack.c.l.b16 %v911
  %v944 = vunpack.c.l.b16 %v912
  %v945 = vunpack.c.l.b16 %v913
  %v946 = vunpack.c.l.b16 %v914
  %v947 = vunpack.c.l.b16 %v915
  %v948 = vunpack.c.l.b16 %v916
  %v949 = vunpack.c.l.b16 %v917
  %v950 = vunpack.c.l.b16 %v918
  %v951 = vunpack.c.l.b16 %v919
  %v952 = vunpack.c.l.b16 %v920
  %v953 = vunpack.c.l.b16 %v921
  %v954 = vunpack.c.l.b16 %v922
  %v955 = vunpack.c.l.b16 %v923
  %v956 = vpack.c.b16 %v941, %v940
  %v957 = vpack.c.b16 %v943, %v942
  %v958 = vpack.c.b16 %v945, %v944
  %v959 = vpack.c.b16 %v947, %v946
  %v960 = vpack.c.b16 %v949, %v948
  %v961 = vpack.c.b16 %v951, %v950
  %v962 = vpack.c.b16 %v953, %v952
  %v963 = vpack.c.b16 %v955, %v954
  %972 = vmatprep.subr.bf16.mxu0 0
  %973 = vmatpush1.bf16.msra.mxu0 %v956
  %974 = vmatprep.subr.bf16.mxu0 0
  %975 = vmatpush1.bf16.msra.mxu0 %v957
  %976 = vmatprep.subr.bf16.mxu0 0
  %977 = vmatpush1.bf16.msra.mxu0 %v958
  %978 = vmatprep.subr.bf16.mxu0 0
  %979 = vmatpush1.bf16.msra.mxu0 %v959
  %980 = vmatprep.subr.bf16.mxu0 0
  %981 = vmatpush1.bf16.msra.mxu0 %v960
  %982 = vmatprep.subr.bf16.mxu0 0
  %983 = vmatpush1.bf16.msra.mxu0 %v961
  %984 = vmatprep.subr.bf16.mxu0 0
  %985 = vmatpush1.bf16.msra.mxu0 %v962
  %986 = vmatprep.subr.bf16.mxu0 0
  %987 = vmatpush1.bf16.msra.mxu0 %v963
  %988 = vmatprep.subr.bf16.mxu0 0
  %989 = vmatpush1.bf16.msra.mxu0 0
  %990 = vmatprep.subr.bf16.mxu0 0
  %991 = vmatpush1.bf16.msra.mxu0 0
  %992 = vmatprep.subr.bf16.mxu0 0
  %993 = vmatpush1.bf16.msra.mxu0 0
  %994 = vmatprep.subr.bf16.mxu0 0
  %995 = vmatpush1.bf16.msra.mxu0 0
  %996 = vmatprep.subr.bf16.mxu0 0
  %997 = vmatpush1.bf16.msra.mxu0 0
  %998 = vmatprep.subr.bf16.mxu0 0
  %999 = vmatpush1.bf16.msra.mxu0 0
  %1000 = vmatprep.subr.bf16.mxu0 0
  %1001 = vmatpush1.bf16.msra.mxu0 0
  %1002 = vmatprep.subr.bf16.mxu0 0
  %1003 = vmatpush1.bf16.msra.mxu0 0
  %1004 = vmatprep.mubr.bf16.mxu0 0
  %1005 = vmatmul.mubr.bf16.gmra.mrb[0].mxu0 %v459
  %v1006 = vpop.f32.mrb[0].mxu0
  %v1007 = vadd.f32 0.0, %v1006
  %v1008 = vpop.f32.mrb[0].mxu0
  %v1009 = vpop.f32.mrb[0].mxu0
  %v1010 = vadd.f32 0.0, %v1009
  %v1011 = vpop.f32.mrb[0].mxu0
  %1012 = vmatprep.mubr.bf16.mxu0 0
  %1013 = vmatmul.mubr.bf16.gmra.mrb[0].mxu0 %v460
  %v1014 = vpop.f32.mrb[0].mxu0
  %v1015 = vadd.f32 0.0, %v1014
  %v1016 = vpop.f32.mrb[0].mxu0
  %v1017 = vpop.f32.mrb[0].mxu0
  %v1018 = vadd.f32 0.0, %v1017
  %v1019 = vpop.f32.mrb[0].mxu0
  %1020 = vdwg.mxu0
  %s1021 = scalar_lea.vmem %s7, 2
  %v1022 = vld [vmem:[%s1021] sm:$0x1]
  %v1024 = vlaneseq
  %v1025 = vshrl.u32 %v1024, 7
  %v1026 = vsub.s32 0, %v1025
  %v1027 = vrot.slane %v1022, %v1026
  %v1029 = vadd.f32 %v1007, %v1027
  %v1030 = vadd.f32 %v1010, %v1027
  %v1031 = vadd.f32 %v1015, %v1027
  %v1032 = vadd.f32 %v1018, %v1027
  %v1033 = vadd.f32 %v904, %v1029
  %v1034 = vadd.f32 %v905, %v1030
  %v1035 = vadd.f32 %v906, %v1031
  %v1036 = vadd.f32 %v907, %v1032
  %v1037 = vmax.f32 %v1033, 0.0
  %v1038 = vmax.f32 %v1034, 0.0
  %v1039 = vmax.f32 %v1035, 0.0
  %v1040 = vmax.f32 %v1036, 0.0
  %v1041 = vld [vmem:[%s8] sm:$0xf]
  %v1042 = vld [vmem:[%s8 + $0x4] sm:$0xf]
  %v1043 = vld [vmem:[%s8 + $0x8] sm:$0xf]
  %v1044 = vld [vmem:[%s8 + $0xc] sm:$0xf]
  %v1045 = vld [vmem:[%s8 + $0x10] sm:$0xf]
  %v1046 = vld [vmem:[%s8 + $0x14] sm:$0xf]
  %v1047 = vld [vmem:[%s8 + $0x18] sm:$0xf]
  %v1048 = vld [vmem:[%s8 + $0x1c] sm:$0xf]
  %v1049 = vpack.c.bf16 %v1038, %v1037
  %v1050 = vpack.c.bf16 %v1040, %v1039
  %v1059 = vunpack.c.l.b16 %v1041
  %v1060 = vunpack.c.l.b16 %v1042
  %v1061 = vunpack.c.l.b16 %v1043
  %v1062 = vunpack.c.l.b16 %v1044
  %v1063 = vunpack.c.l.b16 %v1045
  %v1064 = vunpack.c.l.b16 %v1046
  %v1065 = vunpack.c.l.b16 %v1047
  %v1066 = vunpack.c.l.b16 %v1048
  %v1067 = vpack.c.b16 %v1060, %v1059
  %v1068 = vpack.c.b16 %v1062, %v1061
  %v1069 = vpack.c.b16 %v1064, %v1063
  %v1070 = vpack.c.b16 %v1066, %v1065
  %v1076 = vsel %vm738, %v1049, 0
  %v1079 = vsel %vm738, %v1050, 0
  %1081 = vmatprep.subr.bf16.mxu0 0
  %1082 = vmatpush1.bf16.msra.mxu0 %v1067
  %1083 = vmatprep.subr.bf16.mxu0 0
  %1084 = vmatpush1.bf16.msra.mxu0 %v1068
  %1085 = vmatprep.subr.bf16.mxu0 0
  %1086 = vmatpush1.bf16.msra.mxu0 %v1069
  %1087 = vmatprep.subr.bf16.mxu0 0
  %1088 = vmatpush1.bf16.msra.mxu0 %v1070
  %1089 = vmatprep.subr.bf16.mxu0 0
  %1090 = vmatpush1.bf16.msra.mxu0 0
  %1091 = vmatprep.subr.bf16.mxu0 0
  %1092 = vmatpush1.bf16.msra.mxu0 0
  %1093 = vmatprep.subr.bf16.mxu0 0
  %1094 = vmatpush1.bf16.msra.mxu0 0
  %1095 = vmatprep.subr.bf16.mxu0 0
  %1096 = vmatpush1.bf16.msra.mxu0 0
  %1097 = vmatprep.subr.bf16.mxu0 0
  %1098 = vmatpush1.bf16.msra.mxu0 0
  %1099 = vmatprep.subr.bf16.mxu0 0
  %1100 = vmatpush1.bf16.msra.mxu0 0
  %1101 = vmatprep.subr.bf16.mxu0 0
  %1102 = vmatpush1.bf16.msra.mxu0 0
  %1103 = vmatprep.subr.bf16.mxu0 0
  %1104 = vmatpush1.bf16.msra.mxu0 0
  %1105 = vmatprep.subr.bf16.mxu0 0
  %1106 = vmatpush1.bf16.msra.mxu0 0
  %1107 = vmatprep.subr.bf16.mxu0 0
  %1108 = vmatpush1.bf16.msra.mxu0 0
  %1109 = vmatprep.subr.bf16.mxu0 0
  %1110 = vmatpush1.bf16.msra.mxu0 0
  %1111 = vmatprep.subr.bf16.mxu0 0
  %1112 = vmatpush1.bf16.msra.mxu0 0
  %1113 = vmatprep.mubr.bf16.mxu0 0
  %1114 = vmatmul.mubr.bf16.gmra.mrb[0].mxu0 %v1076
  %v1115 = vpop.f32.mrb[0].mxu0
  %v1116 = vadd.f32 0.0, %v1115
  %v1117 = vpop.f32.mrb[0].mxu0
  %v1118 = vpop.f32.mrb[0].mxu0
  %v1119 = vadd.f32 0.0, %v1118
  %v1120 = vpop.f32.mrb[0].mxu0
  %1121 = vmatprep.mubr.bf16.mxu0 0
  %1122 = vmatmul.mubr.bf16.gmra.mrb[0].mxu0 %v1079
  %v1123 = vpop.f32.mrb[0].mxu0
  %v1124 = vadd.f32 0.0, %v1123
  %v1125 = vpop.f32.mrb[0].mxu0
  %v1126 = vpop.f32.mrb[0].mxu0
  %v1127 = vadd.f32 0.0, %v1126
  %v1128 = vpop.f32.mrb[0].mxu0
  %1129 = vdwg.mxu0
  %v1130 = vrot.slane %v1116, 4
  %v1131 = vrot.slane %v1119, 4
  %v1132 = vrot.slane %v1124, 4
  %v1133 = vrot.slane %v1127, 4
  %vm1134 = vcmp.lt.s32.totalorder %v67, 4
  %v1135 = vsel %vm1134, %v1132, %v1133
  %v1136 = vsel %vm1134, %v1131, %v1132
  %v1137 = vsel %vm1134, %v1130, %v1131
  %v1138 = vsel %vm1134, %v1133, %v1130
  %v1139 = vsel %vm73, %v1138, 0.0
  %v1140 = vsel %vm74, %v1137, 0.0
  %v1141 = vsel %vm73, %v1136, 0.0
  %v1142 = vsel %vm74, %v1135, 0.0
  %s1143 = scalar_lea.vmem %s8, 32
  %v1144 = vld [vmem:[%s1143] sm:$0xf]
  %v1145 = vld [vmem:[%s1143 + $0x4] sm:$0xf]
  %v1146 = vld [vmem:[%s1143 + $0x8] sm:$0xf]
  %v1147 = vld [vmem:[%s1143 + $0xc] sm:$0xf]
  %v1148 = vld [vmem:[%s1143 + $0x10] sm:$0xf]
  %v1149 = vld [vmem:[%s1143 + $0x14] sm:$0xf]
  %v1150 = vld [vmem:[%s1143 + $0x18] sm:$0xf]
  %v1151 = vld [vmem:[%s1143 + $0x1c] sm:$0xf]
  %v1160 = vunpack.c.l.b16 %v1144
  %v1161 = vunpack.c.l.b16 %v1145
  %v1162 = vunpack.c.l.b16 %v1146
  %v1163 = vunpack.c.l.b16 %v1147
  %v1164 = vunpack.c.l.b16 %v1148
  %v1165 = vunpack.c.l.b16 %v1149
  %v1166 = vunpack.c.l.b16 %v1150
  %v1167 = vunpack.c.l.b16 %v1151
  %v1168 = vpack.c.b16 %v1161, %v1160
  %v1169 = vpack.c.b16 %v1163, %v1162
  %v1170 = vpack.c.b16 %v1165, %v1164
  %v1171 = vpack.c.b16 %v1167, %v1166
  %1176 = vmatprep.subr.bf16.mxu0 0
  %1177 = vmatpush1.bf16.msra.mxu0 %v1168
  %1178 = vmatprep.subr.bf16.mxu0 0
  %1179 = vmatpush1.bf16.msra.mxu0 %v1169
  %1180 = vmatprep.subr.bf16.mxu0 0
  %1181 = vmatpush1.bf16.msra.mxu0 %v1170
  %1182 = vmatprep.subr.bf16.mxu0 0
  %1183 = vmatpush1.bf16.msra.mxu0 %v1171
  %1184 = vmatprep.subr.bf16.mxu0 0
  %1185 = vmatpush1.bf16.msra.mxu0 0
  %1186 = vmatprep.subr.bf16.mxu0 0
  %1187 = vmatpush1.bf16.msra.mxu0 0
  %1188 = vmatprep.subr.bf16.mxu0 0
  %1189 = vmatpush1.bf16.msra.mxu0 0
  %1190 = vmatprep.subr.bf16.mxu0 0
  %1191 = vmatpush1.bf16.msra.mxu0 0
  %1192 = vmatprep.subr.bf16.mxu0 0
  %1193 = vmatpush1.bf16.msra.mxu0 0
  %1194 = vmatprep.subr.bf16.mxu0 0
  %1195 = vmatpush1.bf16.msra.mxu0 0
  %1196 = vmatprep.subr.bf16.mxu0 0
  %1197 = vmatpush1.bf16.msra.mxu0 0
  %1198 = vmatprep.subr.bf16.mxu0 0
  %1199 = vmatpush1.bf16.msra.mxu0 0
  %1200 = vmatprep.subr.bf16.mxu0 0
  %1201 = vmatpush1.bf16.msra.mxu0 0
  %1202 = vmatprep.subr.bf16.mxu0 0
  %1203 = vmatpush1.bf16.msra.mxu0 0
  %1204 = vmatprep.subr.bf16.mxu0 0
  %1205 = vmatpush1.bf16.msra.mxu0 0
  %1206 = vmatprep.subr.bf16.mxu0 0
  %1207 = vmatpush1.bf16.msra.mxu0 0
  %1208 = vmatprep.mubr.bf16.mxu0 0
  %1209 = vmatmul.mubr.bf16.gmra.mrb[0].mxu0 %v1076
  %v1210 = vpop.f32.mrb[0].mxu0
  %v1211 = vadd.f32 0.0, %v1210
  %v1212 = vpop.f32.mrb[0].mxu0
  %v1213 = vpop.f32.mrb[0].mxu0
  %v1214 = vadd.f32 0.0, %v1213
  %v1215 = vpop.f32.mrb[0].mxu0
  %1216 = vmatprep.mubr.bf16.mxu0 0
  %1217 = vmatmul.mubr.bf16.gmra.mrb[0].mxu0 %v1079
  %v1218 = vpop.f32.mrb[0].mxu0
  %v1219 = vadd.f32 0.0, %v1218
  %v1220 = vpop.f32.mrb[0].mxu0
  %v1221 = vpop.f32.mrb[0].mxu0
  %v1222 = vadd.f32 0.0, %v1221
  %v1223 = vpop.f32.mrb[0].mxu0
  %1224 = vdwg.mxu0
  %v1225 = vadd.f32 %v1139, %v1211
  %v1226 = vadd.f32 %v1140, %v1214
  %v1227 = vadd.f32 %v1141, %v1219
  %v1228 = vadd.f32 %v1142, %v1222
  %v1229 = vld [vmem:[%s11] sm:$0x1]
  %v1231 = vlaneseq
  %v1232 = vshrl.u32 %v1231, 7
  %v1233 = vsub.s32 0, %v1232
  %v1234 = vrot.slane %v1229, %v1233
  %v1236 = vadd.f32 %v1225, %v1234
  %v1237 = vadd.f32 %v1226, %v1234
  %v1238 = vadd.f32 %v1227, %v1234
  %v1239 = vadd.f32 %v1228, %v1234
  %v1240 = vmax.f32 %v1236, 0.0
  %v1241 = vmax.f32 %v1237, 0.0
  %v1242 = vmax.f32 %v1238, 0.0
  %v1243 = vmax.f32 %v1239, 0.0
  %v1244 = vld [vmem:[%s9] sm:$0xf]
  %v1245 = vld [vmem:[%s9 + $0x4] sm:$0xf]
  %v1246 = vld [vmem:[%s9 + $0x8] sm:$0xf]
  %v1247 = vld [vmem:[%s9 + $0xc] sm:$0xf]
  %v1248 = vpack.c.bf16 %v1241, %v1240
  %v1249 = vpack.c.bf16 %v1243, %v1242
  %v1254 = vunpack.c.l.b16 %v1244
  %v1255 = vunpack.c.l.b16 %v1245
  %v1256 = vunpack.c.l.b16 %v1246
  %v1257 = vunpack.c.l.b16 %v1247
  %v1258 = vpack.c.b16 %v1255, %v1254
  %v1259 = vpack.c.b16 %v1257, %v1256
  %vm1262 = vcmask 261120
  %v1264 = vsel %vm1262, %v1248, 0
  %v1267 = vsel %vm1262, %v1249, 0
  %1269 = vmatprep.subr.bf16.mxu0 0
  %1270 = vmatpush1.bf16.msra.mxu0 %v1258
  %1271 = vmatprep.subr.bf16.mxu0 0
  %1272 = vmatpush1.bf16.msra.mxu0 %v1259
  %1273 = vmatprep.subr.bf16.mxu0 0
  %1274 = vmatpush1.bf16.msra.mxu0 0
  %1275 = vmatprep.subr.bf16.mxu0 0
  %1276 = vmatpush1.bf16.msra.mxu0 0
  %1277 = vmatprep.subr.bf16.mxu0 0
  %1278 = vmatpush1.bf16.msra.mxu0 0
  %1279 = vmatprep.subr.bf16.mxu0 0
  %1280 = vmatpush1.bf16.msra.mxu0 0
  %1281 = vmatprep.subr.bf16.mxu0 0
  %1282 = vmatpush1.bf16.msra.mxu0 0
  %1283 = vmatprep.subr.bf16.mxu0 0
  %1284 = vmatpush1.bf16.msra.mxu0 0
  %1285 = vmatprep.subr.bf16.mxu0 0
  %1286 = vmatpush1.bf16.msra.mxu0 0
  %1287 = vmatprep.subr.bf16.mxu0 0
  %1288 = vmatpush1.bf16.msra.mxu0 0
  %1289 = vmatprep.subr.bf16.mxu0 0
  %1290 = vmatpush1.bf16.msra.mxu0 0
  %1291 = vmatprep.subr.bf16.mxu0 0
  %1292 = vmatpush1.bf16.msra.mxu0 0
  %1293 = vmatprep.subr.bf16.mxu0 0
  %1294 = vmatpush1.bf16.msra.mxu0 0
  %1295 = vmatprep.subr.bf16.mxu0 0
  %1296 = vmatpush1.bf16.msra.mxu0 0
  %1297 = vmatprep.subr.bf16.mxu0 0
  %1298 = vmatpush1.bf16.msra.mxu0 0
  %1299 = vmatprep.subr.bf16.mxu0 0
  %1300 = vmatpush1.bf16.msra.mxu0 0
  %1301 = vmatprep.mubr.bf16.mxu0 0
  %1302 = vmatmul.mubr.bf16.gmra.mrb[0].mxu0 %v1264
  %v1303 = vpop.f32.mrb[0].mxu0
  %v1304 = vadd.f32 0.0, %v1303
  %v1305 = vpop.f32.mrb[0].mxu0
  %v1306 = vpop.f32.mrb[0].mxu0
  %v1307 = vadd.f32 0.0, %v1306
  %v1308 = vpop.f32.mrb[0].mxu0
  %1309 = vmatprep.mubr.bf16.mxu0 0
  %1310 = vmatmul.mubr.bf16.gmra.mrb[0].mxu0 %v1267
  %v1311 = vpop.f32.mrb[0].mxu0
  %v1312 = vadd.f32 0.0, %v1311
  %v1313 = vpop.f32.mrb[0].mxu0
  %v1314 = vpop.f32.mrb[0].mxu0
  %v1315 = vadd.f32 0.0, %v1314
  %v1316 = vpop.f32.mrb[0].mxu0
  %1317 = vdwg.mxu0
  %v1318 = vrot.slane %v1304, 4
  %v1319 = vrot.slane %v1307, 4
  %v1320 = vrot.slane %v1312, 4
  %v1321 = vrot.slane %v1315, 4
  %v1322 = vsel %vm1134, %v1320, %v1321
  %v1323 = vsel %vm1134, %v1319, %v1320
  %v1324 = vsel %vm1134, %v1318, %v1319
  %v1325 = vsel %vm1134, %v1321, %v1318
  %v1326 = vsel %vm73, %v1325, 0.0
  %v1327 = vsel %vm74, %v1324, 0.0
  %v1328 = vsel %vm73, %v1323, 0.0
  %v1329 = vsel %vm74, %v1322, 0.0
  %s1330 = scalar_lea.vmem %s9, 16
  %v1331 = vld [vmem:[%s1330] sm:$0xf]
  %v1332 = vld [vmem:[%s1330 + $0x4] sm:$0xf]
  %v1333 = vld [vmem:[%s1330 + $0x8] sm:$0xf]
  %v1334 = vld [vmem:[%s1330 + $0xc] sm:$0xf]
  %v1339 = vunpack.c.l.b16 %v1331
  %v1340 = vunpack.c.l.b16 %v1332
  %v1341 = vunpack.c.l.b16 %v1333
  %v1342 = vunpack.c.l.b16 %v1334
  %v1343 = vpack.c.b16 %v1340, %v1339
  %v1344 = vpack.c.b16 %v1342, %v1341
  %1347 = vmatprep.subr.bf16.mxu0 0
  %1348 = vmatpush1.bf16.msra.mxu0 %v1343
  %1349 = vmatprep.subr.bf16.mxu0 0
  %1350 = vmatpush1.bf16.msra.mxu0 %v1344
  %1351 = vmatprep.subr.bf16.mxu0 0
  %1352 = vmatpush1.bf16.msra.mxu0 0
  %1353 = vmatprep.subr.bf16.mxu0 0
  %1354 = vmatpush1.bf16.msra.mxu0 0
  %1355 = vmatprep.subr.bf16.mxu0 0
  %1356 = vmatpush1.bf16.msra.mxu0 0
  %1357 = vmatprep.subr.bf16.mxu0 0
  %1358 = vmatpush1.bf16.msra.mxu0 0
  %1359 = vmatprep.subr.bf16.mxu0 0
  %1360 = vmatpush1.bf16.msra.mxu0 0
  %1361 = vmatprep.subr.bf16.mxu0 0
  %1362 = vmatpush1.bf16.msra.mxu0 0
  %1363 = vmatprep.subr.bf16.mxu0 0
  %1364 = vmatpush1.bf16.msra.mxu0 0
  %1365 = vmatprep.subr.bf16.mxu0 0
  %1366 = vmatpush1.bf16.msra.mxu0 0
  %1367 = vmatprep.subr.bf16.mxu0 0
  %1368 = vmatpush1.bf16.msra.mxu0 0
  %1369 = vmatprep.subr.bf16.mxu0 0
  %1370 = vmatpush1.bf16.msra.mxu0 0
  %1371 = vmatprep.subr.bf16.mxu0 0
  %1372 = vmatpush1.bf16.msra.mxu0 0
  %1373 = vmatprep.subr.bf16.mxu0 0
  %1374 = vmatpush1.bf16.msra.mxu0 0
  %1375 = vmatprep.subr.bf16.mxu0 0
  %1376 = vmatpush1.bf16.msra.mxu0 0
  %1377 = vmatprep.subr.bf16.mxu0 0
  %1378 = vmatpush1.bf16.msra.mxu0 0
  %1379 = vmatprep.mubr.bf16.mxu0 0
  %1380 = vmatmul.mubr.bf16.gmra.mrb[0].mxu0 %v1264
  %v1381 = vpop.f32.mrb[0].mxu0
  %v1382 = vadd.f32 0.0, %v1381
  %v1383 = vpop.f32.mrb[0].mxu0
  %v1384 = vpop.f32.mrb[0].mxu0
  %v1385 = vadd.f32 0.0, %v1384
  %v1386 = vpop.f32.mrb[0].mxu0
  %1387 = vmatprep.mubr.bf16.mxu0 0
  %1388 = vmatmul.mubr.bf16.gmra.mrb[0].mxu0 %v1267
  %v1389 = vpop.f32.mrb[0].mxu0
  %v1390 = vadd.f32 0.0, %v1389
  %v1391 = vpop.f32.mrb[0].mxu0
  %v1392 = vpop.f32.mrb[0].mxu0
  %v1393 = vadd.f32 0.0, %v1392
  %v1394 = vpop.f32.mrb[0].mxu0
  %1395 = vdwg.mxu0
  %v1396 = vadd.f32 %v1326, %v1382
  %v1397 = vadd.f32 %v1327, %v1385
  %v1398 = vadd.f32 %v1328, %v1390
  %v1399 = vadd.f32 %v1329, %v1393
  %s1400 = scalar_lea.vmem %s11, 1
  %v1401 = vld [vmem:[%s1400] sm:$0x1]
  %v1403 = vlaneseq
  %v1404 = vshrl.u32 %v1403, 7
  %v1405 = vsub.s32 0, %v1404
  %v1406 = vrot.slane %v1401, %v1405
  %v1408 = vadd.f32 %v1396, %v1406
  %v1409 = vadd.f32 %v1397, %v1406
  %v1410 = vadd.f32 %v1398, %v1406
  %v1411 = vadd.f32 %v1399, %v1406
  %v1412 = vmax.f32 %v1408, 0.0
  %v1413 = vmax.f32 %v1409, 0.0
  %v1414 = vmax.f32 %v1410, 0.0
  %v1415 = vmax.f32 %v1411, 0.0
  %v1416 = vld [vmem:[%s10] sm:$0xf]
  %v1417 = vld [vmem:[%s10 + $0x4] sm:$0xf]
  %v1418 = vld [vmem:[%s10 + $0x8] sm:$0xf]
  %v1419 = vld [vmem:[%s10 + $0xc] sm:$0xf]
  %v1420 = vld [vmem:[%s10 + $0x10] sm:$0xf]
  %v1421 = vld [vmem:[%s10 + $0x14] sm:$0xf]
  %v1422 = vld [vmem:[%s10 + $0x18] sm:$0xf]
  %v1423 = vld [vmem:[%s10 + $0x1c] sm:$0xf]
  %v1432 = vunpack.c.l.b16 %v1416
  %v1433 = vunpack.c.l.b16 %v1417
  %v1434 = vunpack.c.l.b16 %v1418
  %v1435 = vunpack.c.l.b16 %v1419
  %v1436 = vunpack.c.l.b16 %v1420
  %v1437 = vunpack.c.l.b16 %v1421
  %v1438 = vunpack.c.l.b16 %v1422
  %v1439 = vunpack.c.l.b16 %v1423
  %v1440 = vpack.c.b16 %v1433, %v1432
  %v1441 = vpack.c.b16 %v1435, %v1434
  %v1442 = vpack.c.b16 %v1437, %v1436
  %v1443 = vpack.c.b16 %v1439, %v1438
  %1448 = vmatprep.subr.bf16.mxu0 0
  %1449 = vmatpush1.bf16.msra.mxu0 %v1440
  %1450 = vmatprep.subr.bf16.mxu0 0
  %1451 = vmatpush1.bf16.msra.mxu0 %v1441
  %1452 = vmatprep.subr.bf16.mxu0 0
  %1453 = vmatpush1.bf16.msra.mxu0 %v1442
  %1454 = vmatprep.subr.bf16.mxu0 0
  %1455 = vmatpush1.bf16.msra.mxu0 %v1443
  %1456 = vmatprep.subr.bf16.mxu0 0
  %1457 = vmatpush1.bf16.msra.mxu0 0
  %1458 = vmatprep.subr.bf16.mxu0 0
  %1459 = vmatpush1.bf16.msra.mxu0 0
  %1460 = vmatprep.subr.bf16.mxu0 0
  %1461 = vmatpush1.bf16.msra.mxu0 0
  %1462 = vmatprep.subr.bf16.mxu0 0
  %1463 = vmatpush1.bf16.msra.mxu0 0
  %1464 = vmatprep.subr.bf16.mxu0 0
  %1465 = vmatpush1.bf16.msra.mxu0 0
  %1466 = vmatprep.subr.bf16.mxu0 0
  %1467 = vmatpush1.bf16.msra.mxu0 0
  %1468 = vmatprep.subr.bf16.mxu0 0
  %1469 = vmatpush1.bf16.msra.mxu0 0
  %1470 = vmatprep.subr.bf16.mxu0 0
  %1471 = vmatpush1.bf16.msra.mxu0 0
  %1472 = vmatprep.subr.bf16.mxu0 0
  %1473 = vmatpush1.bf16.msra.mxu0 0
  %1474 = vmatprep.subr.bf16.mxu0 0
  %1475 = vmatpush1.bf16.msra.mxu0 0
  %1476 = vmatprep.subr.bf16.mxu0 0
  %1477 = vmatpush1.bf16.msra.mxu0 0
  %1478 = vmatprep.subr.bf16.mxu0 0
  %1479 = vmatpush1.bf16.msra.mxu0 0
  %1480 = vmatprep.mubr.bf16.mxu0 0
  %1481 = vmatmul.mubr.bf16.gmra.mrb[0].mxu0 %v1076
  %v1482 = vpop.f32.mrb[0].mxu0
  %v1483 = vadd.f32 0.0, %v1482
  %v1484 = vpop.f32.mrb[0].mxu0
  %v1485 = vpop.f32.mrb[0].mxu0
  %v1486 = vadd.f32 0.0, %v1485
  %v1487 = vpop.f32.mrb[0].mxu0
  %1488 = vmatprep.mubr.bf16.mxu0 0
  %1489 = vmatmul.mubr.bf16.gmra.mrb[0].mxu0 %v1079
  %v1490 = vpop.f32.mrb[0].mxu0
  %v1491 = vadd.f32 0.0, %v1490
  %v1492 = vpop.f32.mrb[0].mxu0
  %v1493 = vpop.f32.mrb[0].mxu0
  %v1494 = vadd.f32 0.0, %v1493
  %v1495 = vpop.f32.mrb[0].mxu0
  %1496 = vdwg.mxu0
  %s1497 = scalar_lea.vmem %s11, 2
  %v1498 = vld [vmem:[%s1497] sm:$0x1]
  %v1500 = vlaneseq
  %v1501 = vshrl.u32 %v1500, 7
  %v1502 = vsub.s32 0, %v1501
  %v1503 = vrot.slane %v1498, %v1502
  %v1505 = vadd.f32 %v1483, %v1503
  %v1506 = vadd.f32 %v1486, %v1503
  %v1507 = vadd.f32 %v1491, %v1503
  %v1508 = vadd.f32 %v1494, %v1503
  %v1509 = vadd.f32 %v1412, %v1505
  %v1510 = vadd.f32 %v1413, %v1506
  %v1511 = vadd.f32 %v1414, %v1507
  %v1512 = vadd.f32 %v1415, %v1508
  %v1513 = vmax.f32 %v1509, 0.0
  %v1514 = vmax.f32 %v1510, 0.0
  %v1515 = vmax.f32 %v1511, 0.0
  %v1516 = vmax.f32 %v1512, 0.0
  %v1517 = vsel %vm1262, %v1513, 0.0
  %v1518 = vsel %vm1262, %v1514, 0.0
  %v1519 = vadd.f32 %v1517, %v1518
  %v1520 = vrot.slane %v1519, 4
  %v1521 = vadd.f32 %v1519, %v1520
  %v1522 = vrot.slane %v1521, 2
  %v1523 = vadd.f32 %v1521, %v1522
  %v1524 = vrot.slane %v1523, 1
  %v1525 = vadd.f32 %v1523, %v1524
  %v1526 = vsel %vm1262, %v1515, 0.0
  %v1527 = vsel %vm1262, %v1516, 0.0
  %v1528 = vadd.f32 %v1526, %v1527
  %v1529 = vrot.slane %v1528, 4
  %v1530 = vadd.f32 %v1528, %v1529
  %v1531 = vrot.slane %v1530, 2
  %v1532 = vadd.f32 %v1530, %v1531
  %v1533 = vrot.slane %v1532, 1
  %v1534 = vadd.f32 %v1532, %v1533
  %v1535 = vmul.f32 %v1525, 0.0625
  %v1536 = vmul.f32 %v1534, 0.0625
  %v1537 = vld [vmem:[%s12] sm:$0xff]
  %v1538 = vld [vmem:[%s12 + $0x8] sm:$0xff]
  %v1539 = vld [vmem:[%s12 + $0x10] sm:$0xff]
  %v1540 = vld [vmem:[%s12 + $0x18] sm:$0xff]
  %vm1543 = vcmask 1041409
  %v1544 = vsel %vm1543, %v1536, %v1535
  %v1545 = vsel %vm1262, %v1544, 0
  %1547 = vmatprep.subr.mxu0 0.0
  %1548 = vmatpush1.msra.mxu0 %v1537
  %1549 = vmatprep.subr.mxu0 0.0
  %1550 = vmatpush1.msra.mxu0 %v1538
  %1551 = vmatprep.subr.mxu0 0.0
  %1552 = vmatpush1.msra.mxu0 %v1539
  %1553 = vmatprep.subr.mxu0 0.0
  %1554 = vmatpush1.msra.mxu0 %v1540
  %1555 = vmatprep.subr.mxu0 0.0
  %1556 = vmatpush1.msra.mxu0 0.0
  %1557 = vmatprep.subr.mxu0 0.0
  %1558 = vmatpush1.msra.mxu0 0.0
  %1559 = vmatprep.subr.mxu0 0.0
  %1560 = vmatpush1.msra.mxu0 0.0
  %1561 = vmatprep.subr.mxu0 0.0
  %1562 = vmatpush1.msra.mxu0 0.0
  %1563 = vmatprep.subr.mxu0 0.0
  %1564 = vmatpush1.msra.mxu0 0.0
  %1565 = vmatprep.subr.mxu0 0.0
  %1566 = vmatpush1.msra.mxu0 0.0
  %1567 = vmatprep.subr.mxu0 0.0
  %1568 = vmatpush1.msra.mxu0 0.0
  %1569 = vmatprep.subr.mxu0 0.0
  %1570 = vmatpush1.msra.mxu0 0.0
  %1571 = vmatprep.subr.mxu0 0.0
  %1572 = vmatpush1.msra.mxu0 0.0
  %1573 = vmatprep.subr.mxu0 0.0
  %1574 = vmatpush1.msra.mxu0 0.0
  %1575 = vmatprep.subr.mxu0 0.0
  %1576 = vmatpush1.msra.mxu0 0.0
  %1577 = vmatprep.subr.mxu0 0.0
  %1578 = vmatpush1.msra.mxu0 0.0
  %1579 = vmatprep.subr.mxu0 0.0
  %1580 = vmatpush1.msra.mxu0 0.0
  %1581 = vmatprep.subr.mxu0 0.0
  %1582 = vmatpush1.msra.mxu0 0.0
  %1583 = vmatprep.subr.mxu0 0.0
  %1584 = vmatpush1.msra.mxu0 0.0
  %1585 = vmatprep.subr.mxu0 0.0
  %1586 = vmatpush1.msra.mxu0 0.0
  %1587 = vmatprep.subr.mxu0 0.0
  %1588 = vmatpush1.msra.mxu0 0.0
  %1589 = vmatprep.subr.mxu0 0.0
  %1590 = vmatpush1.msra.mxu0 0.0
  %1591 = vmatprep.subr.mxu0 0.0
  %1592 = vmatpush1.msra.mxu0 0.0
  %1593 = vmatprep.subr.mxu0 0.0
  %1594 = vmatpush1.msra.mxu0 0.0
  %1595 = vmatprep.subr.mxu0 0.0
  %1596 = vmatpush1.msra.mxu0 0.0
  %1597 = vmatprep.subr.mxu0 0.0
  %1598 = vmatpush1.msra.mxu0 0.0
  %1599 = vmatprep.subr.mxu0 0.0
  %1600 = vmatpush1.msra.mxu0 0.0
  %1601 = vmatprep.subr.mxu0 0.0
  %1602 = vmatpush1.msra.mxu0 0.0
  %1603 = vmatprep.subr.mxu0 0.0
  %1604 = vmatpush1.msra.mxu0 0.0
  %1605 = vmatprep.subr.mxu0 0.0
  %1606 = vmatpush1.msra.mxu0 0.0
  %1607 = vmatprep.subr.mxu0 0.0
  %1608 = vmatpush1.msra.mxu0 0.0
  %1609 = vmatprep.subr.mxu0 0.0
  %1610 = vmatpush1.msra.mxu0 0.0
  %1611 = vmatprep.mubr.f32.mxu0 0.0
  %1612 = vmatmul.mubr.f32.gmra.mrb[0].mxu0 %v1545
  %v1613 = vpop.f32.mrb[0].mxu0
  %v1614 = vadd.f32 0.0, %v1613
  %v1615 = vpop.f32.mrb[0].mxu0
  %1616 = vdwg.mxu0
  %v1617 = vmax.f32 %v1614, 0.0
  %v1618 = vld [vmem:[%s13] sm:$0x3]
  %vm1619 = vcmask 15360
  %v1621 = vsel %vm1619, %v1617, 0
  %vm1623 = vcmask 1041408
  %v1625 = vsel %vm1623, %v1618, 0
  %1627 = vmatprep.subr.mxu0 0.0
  %1628 = vmatpush1.msra.mxu0 %v1625
  %1629 = vmatprep.subr.mxu0 0.0
  %1630 = vmatpush1.msra.mxu0 0.0
  %1631 = vmatprep.subr.mxu0 0.0
  %1632 = vmatpush1.msra.mxu0 0.0
  %1633 = vmatprep.subr.mxu0 0.0
  %1634 = vmatpush1.msra.mxu0 0.0
  %1635 = vmatprep.subr.mxu0 0.0
  %1636 = vmatpush1.msra.mxu0 0.0
  %1637 = vmatprep.subr.mxu0 0.0
  %1638 = vmatpush1.msra.mxu0 0.0
  %1639 = vmatprep.subr.mxu0 0.0
  %1640 = vmatpush1.msra.mxu0 0.0
  %1641 = vmatprep.subr.mxu0 0.0
  %1642 = vmatpush1.msra.mxu0 0.0
  %1643 = vmatprep.subr.mxu0 0.0
  %1644 = vmatpush1.msra.mxu0 0.0
  %1645 = vmatprep.subr.mxu0 0.0
  %1646 = vmatpush1.msra.mxu0 0.0
  %1647 = vmatprep.subr.mxu0 0.0
  %1648 = vmatpush1.msra.mxu0 0.0
  %1649 = vmatprep.subr.mxu0 0.0
  %1650 = vmatpush1.msra.mxu0 0.0
  %1651 = vmatprep.subr.mxu0 0.0
  %1652 = vmatpush1.msra.mxu0 0.0
  %1653 = vmatprep.subr.mxu0 0.0
  %1654 = vmatpush1.msra.mxu0 0.0
  %1655 = vmatprep.subr.mxu0 0.0
  %1656 = vmatpush1.msra.mxu0 0.0
  %1657 = vmatprep.subr.mxu0 0.0
  %1658 = vmatpush1.msra.mxu0 0.0
  %1659 = vmatprep.subr.mxu0 0.0
  %1660 = vmatpush1.msra.mxu0 0.0
  %1661 = vmatprep.subr.mxu0 0.0
  %1662 = vmatpush1.msra.mxu0 0.0
  %1663 = vmatprep.subr.mxu0 0.0
  %1664 = vmatpush1.msra.mxu0 0.0
  %1665 = vmatprep.subr.mxu0 0.0
  %1666 = vmatpush1.msra.mxu0 0.0
  %1667 = vmatprep.subr.mxu0 0.0
  %1668 = vmatpush1.msra.mxu0 0.0
  %1669 = vmatprep.subr.mxu0 0.0
  %1670 = vmatpush1.msra.mxu0 0.0
  %1671 = vmatprep.subr.mxu0 0.0
  %1672 = vmatpush1.msra.mxu0 0.0
  %1673 = vmatprep.subr.mxu0 0.0
  %1674 = vmatpush1.msra.mxu0 0.0
  %1675 = vmatprep.subr.mxu0 0.0
  %1676 = vmatpush1.msra.mxu0 0.0
  %1677 = vmatprep.subr.mxu0 0.0
  %1678 = vmatpush1.msra.mxu0 0.0
  %1679 = vmatprep.subr.mxu0 0.0
  %1680 = vmatpush1.msra.mxu0 0.0
  %1681 = vmatprep.subr.mxu0 0.0
  %1682 = vmatpush1.msra.mxu0 0.0
  %1683 = vmatprep.subr.mxu0 0.0
  %1684 = vmatpush1.msra.mxu0 0.0
  %1685 = vmatprep.subr.mxu0 0.0
  %1686 = vmatpush1.msra.mxu0 0.0
  %1687 = vmatprep.subr.mxu0 0.0
  %1688 = vmatpush1.msra.mxu0 0.0
  %1689 = vmatprep.subr.mxu0 0.0
  %1690 = vmatpush1.msra.mxu0 0.0
  %1691 = vmatprep.mubr.f32.mxu0 0.0
  %1692 = vmatmul.mubr.f32.gmra.mrb[0].mxu0 %v1621
  %v1693 = vpop.f32.mrb[0].mxu0
  %v1694 = vadd.f32 0.0, %v1693
  %v1695 = vpop.f32.mrb[0].mxu0
  %1696 = vdwg.mxu0
  %v1697 = vxor.u32 %v1694, 2147483648
  %v1698 = vmul.f32 %v1697, 1.442695
  %v1699 = vpow.pop %v1698
  %v1700 = vadd.f32 %v1699, 1.0
  %v1701 = vrcp.pop %v1700
  %v1702 = vmul.f32 1.0, %v1701
  %v1703 = vadd.f32 %v1702, 1.0
  %v1705 = vrot.slane %v1703, 1
  %v1708 = vmul.f32 %v1535, %v1703
  %v1709 = vmul.f32 %v1536, %v1705
  %v1710 = vld [vmem:[%s14] sm:$0xff]
  %v1711 = vld [vmem:[%s14 + $0x8] sm:$0xff]
  %v1712 = vld [vmem:[%s14 + $0x10] sm:$0xff]
  %v1713 = vld [vmem:[%s14 + $0x18] sm:$0xff]
  %v1714 = vld [vmem:[%s15] sm:$0x1]
  %v1716 = vlaneseq
  %v1717 = vshrl.u32 %v1716, 7
  %v1718 = vsub.s32 0, %v1717
  %v1719 = vrot.slane %v1714, %v1718
  %v1723 = vrot.slane %v1709, 7
  %v1724 = vsel %vm1543, %v1723, %v1708
  %v1725 = vsel %vm1262, %v1724, 0
  %1727 = vmatprep.subr.mxu0 0.0
  %1728 = vmatpush1.msra.mxu0 %v1710
  %1729 = vmatprep.subr.mxu0 0.0
  %1730 = vmatpush1.msra.mxu0 %v1711
  %1731 = vmatprep.subr.mxu0 0.0
  %1732 = vmatpush1.msra.mxu0 %v1712
  %1733 = vmatprep.subr.mxu0 0.0
  %1734 = vmatpush1.msra.mxu0 %v1713
  %1735 = vmatprep.subr.mxu0 0.0
  %1736 = vmatpush1.msra.mxu0 0.0
  %1737 = vmatprep.subr.mxu0 0.0
  %1738 = vmatpush1.msra.mxu0 0.0
  %1739 = vmatprep.subr.mxu0 0.0
  %1740 = vmatpush1.msra.mxu0 0.0
  %1741 = vmatprep.subr.mxu0 0.0
  %1742 = vmatpush1.msra.mxu0 0.0
  %1743 = vmatprep.subr.mxu0 0.0
  %1744 = vmatpush1.msra.mxu0 0.0
  %1745 = vmatprep.subr.mxu0 0.0
  %1746 = vmatpush1.msra.mxu0 0.0
  %1747 = vmatprep.subr.mxu0 0.0
  %1748 = vmatpush1.msra.mxu0 0.0
  %1749 = vmatprep.subr.mxu0 0.0
  %1750 = vmatpush1.msra.mxu0 0.0
  %1751 = vmatprep.subr.mxu0 0.0
  %1752 = vmatpush1.msra.mxu0 0.0
  %1753 = vmatprep.subr.mxu0 0.0
  %1754 = vmatpush1.msra.mxu0 0.0
  %1755 = vmatprep.subr.mxu0 0.0
  %1756 = vmatpush1.msra.mxu0 0.0
  %1757 = vmatprep.subr.mxu0 0.0
  %1758 = vmatpush1.msra.mxu0 0.0
  %1759 = vmatprep.subr.mxu0 0.0
  %1760 = vmatpush1.msra.mxu0 0.0
  %1761 = vmatprep.subr.mxu0 0.0
  %1762 = vmatpush1.msra.mxu0 0.0
  %1763 = vmatprep.subr.mxu0 0.0
  %1764 = vmatpush1.msra.mxu0 0.0
  %1765 = vmatprep.subr.mxu0 0.0
  %1766 = vmatpush1.msra.mxu0 0.0
  %1767 = vmatprep.subr.mxu0 0.0
  %1768 = vmatpush1.msra.mxu0 0.0
  %1769 = vmatprep.subr.mxu0 0.0
  %1770 = vmatpush1.msra.mxu0 0.0
  %1771 = vmatprep.subr.mxu0 0.0
  %1772 = vmatpush1.msra.mxu0 0.0
  %1773 = vmatprep.subr.mxu0 0.0
  %1774 = vmatpush1.msra.mxu0 0.0
  %1775 = vmatprep.subr.mxu0 0.0
  %1776 = vmatpush1.msra.mxu0 0.0
  %1777 = vmatprep.subr.mxu0 0.0
  %1778 = vmatpush1.msra.mxu0 0.0
  %1779 = vmatprep.subr.mxu0 0.0
  %1780 = vmatpush1.msra.mxu0 0.0
  %1781 = vmatprep.subr.mxu0 0.0
  %1782 = vmatpush1.msra.mxu0 0.0
  %1783 = vmatprep.subr.mxu0 0.0
  %1784 = vmatpush1.msra.mxu0 0.0
  %1785 = vmatprep.subr.mxu0 0.0
  %1786 = vmatpush1.msra.mxu0 0.0
  %1787 = vmatprep.subr.mxu0 0.0
  %1788 = vmatpush1.msra.mxu0 0.0
  %1789 = vmatprep.subr.mxu0 0.0
  %1790 = vmatpush1.msra.mxu0 0.0
  %1791 = vmatprep.mubr.f32.mxu0 0.0
  %1792 = vmatmul.mubr.f32.gmra.mrb[0].mxu0 %v1725
  %v1793 = vpop.f32.mrb[0].mxu0
  %v1794 = vadd.f32 %v1719, %v1793
  %v1795 = vpop.f32.mrb[0].mxu0
  %1796 = vdwg.mxu0
  %v1797 = vmax.f32 %v1794, 0.0
  %v1798 = vld [vmem:[%s16] sm:$0xff]
  %v1799 = vld [vmem:[%s16 + $0x8] sm:$0xff]
  %v1800 = vld [vmem:[%s16 + $0x10] sm:$0xff]
  %v1801 = vld [vmem:[%s16 + $0x18] sm:$0xff]
  %v1802 = vld [vmem:[#allocation2] sm:$0x1]
  %v1804 = vlaneseq
  %v1805 = vshrl.u32 %v1804, 7
  %v1806 = vsub.s32 0, %v1805
  %v1807 = vrot.slane %v1802, %v1806
  %v1810 = vsel %vm1262, %v1797, 0
  %1812 = vmatprep.subr.mxu0 0.0
  %1813 = vmatpush1.msra.mxu0 %v1798
  %1814 = vmatprep.subr.mxu0 0.0
  %1815 = vmatpush1.msra.mxu0 %v1799
  %1816 = vmatprep.subr.mxu0 0.0
  %1817 = vmatpush1.msra.mxu0 %v1800
  %1818 = vmatprep.subr.mxu0 0.0
  %1819 = vmatpush1.msra.mxu0 %v1801
  %1820 = vmatprep.subr.mxu0 0.0
  %1821 = vmatpush1.msra.mxu0 0.0
  %1822 = vmatprep.subr.mxu0 0.0
  %1823 = vmatpush1.msra.mxu0 0.0
  %1824 = vmatprep.subr.mxu0 0.0
  %1825 = vmatpush1.msra.mxu0 0.0
  %1826 = vmatprep.subr.mxu0 0.0
  %1827 = vmatpush1.msra.mxu0 0.0
  %1828 = vmatprep.subr.mxu0 0.0
  %1829 = vmatpush1.msra.mxu0 0.0
  %1830 = vmatprep.subr.mxu0 0.0
  %1831 = vmatpush1.msra.mxu0 0.0
  %1832 = vmatprep.subr.mxu0 0.0
  %1833 = vmatpush1.msra.mxu0 0.0
  %1834 = vmatprep.subr.mxu0 0.0
  %1835 = vmatpush1.msra.mxu0 0.0
  %1836 = vmatprep.subr.mxu0 0.0
  %1837 = vmatpush1.msra.mxu0 0.0
  %1838 = vmatprep.subr.mxu0 0.0
  %1839 = vmatpush1.msra.mxu0 0.0
  %1840 = vmatprep.subr.mxu0 0.0
  %1841 = vmatpush1.msra.mxu0 0.0
  %1842 = vmatprep.subr.mxu0 0.0
  %1843 = vmatpush1.msra.mxu0 0.0
  %1844 = vmatprep.subr.mxu0 0.0
  %1845 = vmatpush1.msra.mxu0 0.0
  %1846 = vmatprep.subr.mxu0 0.0
  %1847 = vmatpush1.msra.mxu0 0.0
  %1848 = vmatprep.subr.mxu0 0.0
  %1849 = vmatpush1.msra.mxu0 0.0
  %1850 = vmatprep.subr.mxu0 0.0
  %1851 = vmatpush1.msra.mxu0 0.0
  %1852 = vmatprep.subr.mxu0 0.0
  %1853 = vmatpush1.msra.mxu0 0.0
  %1854 = vmatprep.subr.mxu0 0.0
  %1855 = vmatpush1.msra.mxu0 0.0
  %1856 = vmatprep.subr.mxu0 0.0
  %1857 = vmatpush1.msra.mxu0 0.0
  %1858 = vmatprep.subr.mxu0 0.0
  %1859 = vmatpush1.msra.mxu0 0.0
  %1860 = vmatprep.subr.mxu0 0.0
  %1861 = vmatpush1.msra.mxu0 0.0
  %1862 = vmatprep.subr.mxu0 0.0
  %1863 = vmatpush1.msra.mxu0 0.0
  %1864 = vmatprep.subr.mxu0 0.0
  %1865 = vmatpush1.msra.mxu0 0.0
  %1866 = vmatprep.subr.mxu0 0.0
  %1867 = vmatpush1.msra.mxu0 0.0
  %1868 = vmatprep.subr.mxu0 0.0
  %1869 = vmatpush1.msra.mxu0 0.0
  %1870 = vmatprep.subr.mxu0 0.0
  %1871 = vmatpush1.msra.mxu0 0.0
  %1872 = vmatprep.subr.mxu0 0.0
  %1873 = vmatpush1.msra.mxu0 0.0
  %1874 = vmatprep.subr.mxu0 0.0
  %1875 = vmatpush1.msra.mxu0 0.0
  %1876 = vmatprep.mubr.f32.mxu0 0.0
  %1877 = vmatmul.mubr.f32.gmra.mrb[0].mxu0 %v1810
  %v1878 = vpop.f32.mrb[0].mxu0
  %v1879 = vadd.f32 %v1807, %v1878
  %v1880 = vpop.f32.mrb[0].mxu0
  %1881 = vdwg.mxu0
  %vm1882 = vcmask 1024
  %1883 = vst.msk [vmem:[%s18] sm:$0x3] %vm1882, %v1879
  // Predicated region
  $region74: #{tcnse_forward.1} parent=0 // pred_check
    _
  $region75: #{tcnse_forward.1} parent=0 // pred_check_branch
    %1885 = sbr.rel (0) target = $region77
  $region76: #{tcnse_forward.1} parent=0 // pred_region
    _
  $region77: #{tcnse_forward.1} parent=0 // pred_fallthru
    _
  // Predicated region
  $region78: #{tcnse_forward.1} parent=0 // pred_check
    _
  $region79: #{tcnse_forward.1} parent=0 // pred_check_branch
    %1887 = sbr.rel (0) target = $region81
  $region80: #{tcnse_forward.1} parent=0 // pred_region
    _
  $region81: #{tcnse_forward.1} parent=0 // pred_fallthru
    _

</llo_original>
